<compile_context>
chip_gen: v7x
topology: tpu7x:2x2x1
jax: 0.10.0
libtpu: 0.0.40
codegen_flags: <defaults>
</compile_context>

<pallas_src>
import functools
import math

import jax
import jax.numpy as jnp
from jax.experimental import pallas as pl
from jax.experimental.pallas import tpu as pltpu


def _round_up(a, b):
    return (a + b - 1) // b * b


def encoder_bn_kernel(x_ref, w0_ref, b0_ref, wmid_ref, bmid_ref,
                      whead_ref, bhead_ref, out_ref, *, num_mid):
    # Patch-embedding conv (4x4 / stride 4) as a GEMM over im2col'ed patches.
    # Inputs/weights are bf16, accumulation is f32 on the MXU.
    h = jnp.dot(x_ref[...], w0_ref[...],
                preferred_element_type=jnp.float32) + b0_ref[...]
    h = jnp.maximum(h, 0.0)

    # Six 1x1-conv + ReLU blocks (static unroll; weights already (in, out)).
    for i in range(num_mid):
        h = jnp.dot(h.astype(jnp.bfloat16), wmid_ref[i],
                    preferred_element_type=jnp.float32) + bmid_ref[i]
        h = jnp.maximum(h, 0.0)

    # Head 1x1 conv (no ReLU).
    logits = jnp.dot(h.astype(jnp.bfloat16), whead_ref[...],
                     preferred_element_type=jnp.float32) + bhead_ref[...]

    # log_softmax over channels (last / lane axis), numerically stable, f32.
    m = jnp.max(logits, axis=-1, keepdims=True)
    z = logits - m
    lse = jnp.log(jnp.sum(jnp.exp(z), axis=-1, keepdims=True))
    out_ref[...] = z - lse


def _pick_tm(m):
    """Row-tile size: big enough to amortize per-step overhead, but always
    giving >= 2 grid steps when possible so both v7x TensorCores get work."""
    m8 = _round_up(max(m, 1), 8)
    if m8 <= 16:
        return m8                      # too small to split
    return min(512, _round_up(m8 // 2, 8))


def encoder_bn(x, params, *, channels_last=False):
    B, L, C, H, W = x.shape
    stem = params["conv0_b"].shape[0]
    vocab = params["head_b"].shape[0]
    num_mid = params["mid_w"].shape[0]
    Hp, Wp = H // 4, W // 4
    BL = B * L
    M = BL * Hp * Wp
    K = C * 16

    # im2col for the stride-4 / kernel-4 conv: (M, C*4*4), flatten order (c,kh,kw).
    patches = x.reshape(BL, C, Hp, 4, Wp, 4)
    patches = patches.transpose(0, 2, 4, 1, 3, 5).reshape(M, K)
    patches = patches.astype(jnp.bfloat16)

    # Pre-transposed weights (in, out), cast to bf16; biases stay f32 rows.
    w0 = params["conv0_w"].reshape(stem, K).T.astype(jnp.bfloat16)        # (K, stem)
    b0 = params["conv0_b"].reshape(1, stem).astype(jnp.float32)
    wmid = params["mid_w"].reshape(num_mid, stem, stem).transpose(0, 2, 1)
    wmid = wmid.astype(jnp.bfloat16)                                      # (n, stem, stem)
    bmid = params["mid_b"].reshape(num_mid, 1, stem).astype(jnp.float32)
    whead = params["head_w"].reshape(vocab, stem).T.astype(jnp.bfloat16)  # (stem, vocab)
    bhead = params["head_b"].reshape(1, vocab).astype(jnp.float32)

    TM = _pick_tm(M)
    M_pad = _round_up(M, TM)
    if M_pad != M:
        patches = jnp.pad(patches, ((0, M_pad - M), (0, 0)))

    kernel = functools.partial(encoder_bn_kernel, num_mid=num_mid)

    def const_spec(shape):
        # Grid-invariant operand: single VMEM buffer (no double-buffering).
        zeros = (0,) * len(shape)
        return pl.BlockSpec(shape, lambda i: zeros, pipeline_mode=pl.Buffered(1))

    out = pl.pallas_call(
        kernel,
        out_shape=jax.ShapeDtypeStruct((M_pad, vocab), jnp.float32),
        grid=(M_pad // TM,),
        in_specs=[
            pl.BlockSpec((TM, K), lambda i: (i, 0)),                   # pixel tile
            const_spec((K, stem)), const_spec((1, stem)),              # patch-embed conv
            const_spec((num_mid, stem, stem)),                         # 1x1 conv stack
            const_spec((num_mid, 1, stem)),
            const_spec((stem, vocab)), const_spec((1, vocab)),         # head conv
        ],
        out_specs=pl.BlockSpec((TM, vocab), lambda i: (i, 0)),
        compiler_params=pltpu.CompilerParams(
            # On v7x, CORE_PARALLEL on this axis splits tiles across the 2 TCs.
            dimension_semantics=(pltpu.PARALLEL,)),
    )(patches, w0, b0, wmid, bmid, whead, bhead)

    out = out[:M].reshape(B, L, Hp, Wp, vocab)
    if channels_last:
        # Skip the channel-first transpose (saves a full HBM pass) when the
        # consumer can take [B, L, H/4, W/4, vocab].
        return out
    # Module-faithful layout [B, L, vocab, H/4, W/4].
    return out.transpose(0, 1, 4, 2, 3)


def reference(x, params):
    """Pure-JAX reference mirroring the PyTorch forward (real convs, f32)."""
    B, L, C, H, W = x.shape
    num_mid = params["mid_w"].shape[0]
    vocab = params["head_b"].shape[0]
    dn = ("NCHW", "OIHW", "NCHW")
    y = x.reshape(B * L, C, H, W)
    y = jax.lax.conv_general_dilated(y, params["conv0_w"], (4, 4), "VALID",
                                     dimension_numbers=dn)
    y = jnp.maximum(y + params["conv0_b"][None, :, None, None], 0.0)
    for i in range(num_mid):
        y = jax.lax.conv_general_dilated(y, params["mid_w"][i], (1, 1), "VALID",
                                         dimension_numbers=dn)
        y = jnp.maximum(y + params["mid_b"][i][None, :, None, None], 0.0)
    y = jax.lax.conv_general_dilated(y, params["head_w"], (1, 1), "VALID",
                                     dimension_numbers=dn)
    y = y + params["head_b"][None, :, None, None]
    y = jax.nn.log_softmax(y, axis=1)
    return y.reshape(B, L, vocab, H // 4, W // 4)


def init_params(key, in_channels, stem_channels, vocab_size, num_mid=6):
    ks = jax.random.split(key, 6)

    def u(k, shape, fan_in):
        bound = 1.0 / math.sqrt(fan_in)
        return jax.random.uniform(k, shape, jnp.float32, -bound, bound)

    return dict(
        conv0_w=u(ks[0], (stem_channels, in_channels, 4, 4), in_channels * 16),
        conv0_b=u(ks[1], (stem_channels,), in_channels * 16),
        mid_w=u(ks[2], (num_mid, stem_channels, stem_channels, 1, 1), stem_channels),
        mid_b=u(ks[3], (num_mid, stem_channels), stem_channels),
        head_w=u(ks[4], (vocab_size, stem_channels, 1, 1), stem_channels),
        head_b=u(ks[5], (vocab_size,), stem_channels),
    )


if __name__ == "__main__":
    # Small shapes consistent with EncoderBN.forward: x is [B, L, C, H, W].
    B, L = 2, 4
    in_channels, H, W = 4, 16, 16
    stem_channels, vocab_size = 64, 128   # vocab on the 128-lane axis (lane-dense out)

    key = jax.random.PRNGKey(0)
    kx, kp = jax.random.split(key)
    x = jax.random.normal(kx, (B, L, in_channels, H, W), dtype=jnp.float32)
    params = init_params(kp, in_channels, stem_channels, vocab_size)

    run = jax.jit(encoder_bn)
    out = jax.block_until_ready(run(x, params))

    ref = reference(x, params)
    assert out.shape == (B, L, vocab_size, H // 4, W // 4), out.shape
    max_err = float(jnp.max(jnp.abs(out - ref)))
    # bf16 matmul inputs with f32 accumulation: small extra rounding vs f32 ref.
    assert jnp.allclose(out, ref, atol=5e-2, rtol=5e-2), max_err

    print("KERNEL_OK")
</pallas_src>

<mosaic_0001>
module attributes {stable_mosaic.version = 11 : i64} {
  func.func @encoder_bn_kernel(%arg0: i32, %arg1: memref<64x64xbf16, #tpu.memory_space<vmem>>, %arg2: memref<64x64xbf16, #tpu.memory_space<vmem>>, %arg3: memref<1x64xf32, #tpu.memory_space<vmem>>, %arg4: memref<6x64x64xbf16, #tpu.memory_space<vmem>>, %arg5: memref<6x1x64xf32, #tpu.memory_space<vmem>>, %arg6: memref<64x128xbf16, #tpu.memory_space<vmem>>, %arg7: memref<1x128xf32, #tpu.memory_space<vmem>>, %arg8: memref<64x128xf32, #tpu.memory_space<vmem>>) attributes {dimension_semantics = [#tpu.dimension_semantics<parallel>], iteration_bounds = array<i64: 2>, scalar_prefetch = 0 : i64, scratch_operands = 0 : i64, tpu.core_type = #tpu.core_type<tc>, window_params = [{transform_indices = @transform_0, window_bounds = array<i64: 64, 64>}, {pipeline_mode = #tpu.pipeline_mode<synchronous>, transform_indices = @transform_1, window_bounds = array<i64: 64, 64>}, {pipeline_mode = #tpu.pipeline_mode<synchronous>, transform_indices = @transform_2, window_bounds = array<i64: 1, 64>}, {pipeline_mode = #tpu.pipeline_mode<synchronous>, transform_indices = @transform_3, window_bounds = array<i64: 6, 64, 64>}, {pipeline_mode = #tpu.pipeline_mode<synchronous>, transform_indices = @transform_4, window_bounds = array<i64: 6, 1, 64>}, {pipeline_mode = #tpu.pipeline_mode<synchronous>, transform_indices = @transform_5, window_bounds = array<i64: 64, 128>}, {pipeline_mode = #tpu.pipeline_mode<synchronous>, transform_indices = @transform_6, window_bounds = array<i64: 1, 128>}, {transform_indices = @transform_7, window_bounds = array<i64: 64, 128>}]} {
    %c0 = arith.constant 0 : index
    %c0_0 = arith.constant 0 : index
    %0 = vector.load %arg1[%c0, %c0_0] : memref<64x64xbf16, #tpu.memory_space<vmem>>, vector<64x64xbf16>
    %c0_1 = arith.constant 0 : index
    %c0_2 = arith.constant 0 : index
    %1 = vector.load %arg2[%c0_1, %c0_2] : memref<64x64xbf16, #tpu.memory_space<vmem>>, vector<64x64xbf16>
    %cst = arith.constant dense<0.000000e+00> : vector<64x64xf32>
    %2 = tpu.matmul %0, %1, %cst {dimension_numbers = #tpu.dot_dimension_numbers<[1], [0], [0], [1], [0, 0, 1, 1], [], []>} : vector<64x64xbf16>, vector<64x64xbf16>, vector<64x64xf32> -> vector<64x64xf32>
    %c0_3 = arith.constant 0 : index
    %c0_4 = arith.constant 0 : index
    %3 = vector.load %arg3[%c0_3, %c0_4] : memref<1x64xf32, #tpu.memory_space<vmem>>, vector<1x64xf32>
    %4 = vector.broadcast %3 : vector<1x64xf32> to vector<64x64xf32>
    %5 = arith.addf %2, %4 : vector<64x64xf32>
    %cst_5 = arith.constant 0.000000e+00 : f32
    %6 = vector.broadcast %cst_5 : f32 to vector<64x64xf32>
    %7 = arith.maximumf %5, %6 : vector<64x64xf32>
    %8 = arith.truncf %7 : vector<64x64xf32> to vector<64x64xbf16>
    %c0_6 = arith.constant 0 : index
    %c0_7 = arith.constant 0 : index
    %c0_8 = arith.constant 0 : index
    %9 = vector.load %arg4[%c0_6, %c0_7, %c0_8] : memref<6x64x64xbf16, #tpu.memory_space<vmem>>, vector<1x64x64xbf16>
    %10 = vector.shape_cast %9 : vector<1x64x64xbf16> to vector<64x64xbf16>
    %cst_9 = arith.constant dense<0.000000e+00> : vector<64x64xf32>
    %11 = tpu.matmul %8, %10, %cst_9 {dimension_numbers = #tpu.dot_dimension_numbers<[1], [0], [0], [1], [0, 0, 1, 1], [], []>} : vector<64x64xbf16>, vector<64x64xbf16>, vector<64x64xf32> -> vector<64x64xf32>
    %c0_10 = arith.constant 0 : index
    %c0_11 = arith.constant 0 : index
    %c0_12 = arith.constant 0 : index
    %12 = vector.load %arg5[%c0_10, %c0_11, %c0_12] : memref<6x1x64xf32, #tpu.memory_space<vmem>>, vector<1x1x64xf32>
    %13 = vector.shape_cast %12 : vector<1x1x64xf32> to vector<1x64xf32>
    %14 = vector.broadcast %13 : vector<1x64xf32> to vector<64x64xf32>
    %15 = arith.addf %11, %14 : vector<64x64xf32>
    %cst_13 = arith.constant 0.000000e+00 : f32
    %16 = vector.broadcast %cst_13 : f32 to vector<64x64xf32>
    %17 = arith.maximumf %15, %16 : vector<64x64xf32>
    %18 = arith.truncf %17 : vector<64x64xf32> to vector<64x64xbf16>
    %c1 = arith.constant 1 : index
    %c0_14 = arith.constant 0 : index
    %c0_15 = arith.constant 0 : index
    %19 = vector.load %arg4[%c1, %c0_14, %c0_15] : memref<6x64x64xbf16, #tpu.memory_space<vmem>>, vector<1x64x64xbf16>
    %20 = vector.shape_cast %19 : vector<1x64x64xbf16> to vector<64x64xbf16>
    %cst_16 = arith.constant dense<0.000000e+00> : vector<64x64xf32>
    %21 = tpu.matmul %18, %20, %cst_16 {dimension_numbers = #tpu.dot_dimension_numbers<[1], [0], [0], [1], [0, 0, 1, 1], [], []>} : vector<64x64xbf16>, vector<64x64xbf16>, vector<64x64xf32> -> vector<64x64xf32>
    %c1_17 = arith.constant 1 : index
    %c0_18 = arith.constant 0 : index
    %c0_19 = arith.constant 0 : index
    %22 = vector.load %arg5[%c1_17, %c0_18, %c0_19] : memref<6x1x64xf32, #tpu.memory_space<vmem>>, vector<1x1x64xf32>
    %23 = vector.shape_cast %22 : vector<1x1x64xf32> to vector<1x64xf32>
    %24 = vector.broadcast %23 : vector<1x64xf32> to vector<64x64xf32>
    %25 = arith.addf %21, %24 : vector<64x64xf32>
    %cst_20 = arith.constant 0.000000e+00 : f32
    %26 = vector.broadcast %cst_20 : f32 to vector<64x64xf32>
    %27 = arith.maximumf %25, %26 : vector<64x64xf32>
    %28 = arith.truncf %27 : vector<64x64xf32> to vector<64x64xbf16>
    %c2 = arith.constant 2 : index
    %c0_21 = arith.constant 0 : index
    %c0_22 = arith.constant 0 : index
    %29 = vector.load %arg4[%c2, %c0_21, %c0_22] : memref<6x64x64xbf16, #tpu.memory_space<vmem>>, vector<1x64x64xbf16>
    %30 = vector.shape_cast %29 : vector<1x64x64xbf16> to vector<64x64xbf16>
    %cst_23 = arith.constant dense<0.000000e+00> : vector<64x64xf32>
    %31 = tpu.matmul %28, %30, %cst_23 {dimension_numbers = #tpu.dot_dimension_numbers<[1], [0], [0], [1], [0, 0, 1, 1], [], []>} : vector<64x64xbf16>, vector<64x64xbf16>, vector<64x64xf32> -> vector<64x64xf32>
    %c2_24 = arith.constant 2 : index
    %c0_25 = arith.constant 0 : index
    %c0_26 = arith.constant 0 : index
    %32 = vector.load %arg5[%c2_24, %c0_25, %c0_26] : memref<6x1x64xf32, #tpu.memory_space<vmem>>, vector<1x1x64xf32>
    %33 = vector.shape_cast %32 : vector<1x1x64xf32> to vector<1x64xf32>
    %34 = vector.broadcast %33 : vector<1x64xf32> to vector<64x64xf32>
    %35 = arith.addf %31, %34 : vector<64x64xf32>
    %cst_27 = arith.constant 0.000000e+00 : f32
    %36 = vector.broadcast %cst_27 : f32 to vector<64x64xf32>
    %37 = arith.maximumf %35, %36 : vector<64x64xf32>
    %38 = arith.truncf %37 : vector<64x64xf32> to vector<64x64xbf16>
    %c3 = arith.constant 3 : index
    %c0_28 = arith.constant 0 : index
    %c0_29 = arith.constant 0 : index
    %39 = vector.load %arg4[%c3, %c0_28, %c0_29] : memref<6x64x64xbf16, #tpu.memory_space<vmem>>, vector<1x64x64xbf16>
    %40 = vector.shape_cast %39 : vector<1x64x64xbf16> to vector<64x64xbf16>
    %cst_30 = arith.constant dense<0.000000e+00> : vector<64x64xf32>
    %41 = tpu.matmul %38, %40, %cst_30 {dimension_numbers = #tpu.dot_dimension_numbers<[1], [0], [0], [1], [0, 0, 1, 1], [], []>} : vector<64x64xbf16>, vector<64x64xbf16>, vector<64x64xf32> -> vector<64x64xf32>
    %c3_31 = arith.constant 3 : index
    %c0_32 = arith.constant 0 : index
    %c0_33 = arith.constant 0 : index
    %42 = vector.load %arg5[%c3_31, %c0_32, %c0_33] : memref<6x1x64xf32, #tpu.memory_space<vmem>>, vector<1x1x64xf32>
    %43 = vector.shape_cast %42 : vector<1x1x64xf32> to vector<1x64xf32>
    %44 = vector.broadcast %43 : vector<1x64xf32> to vector<64x64xf32>
    %45 = arith.addf %41, %44 : vector<64x64xf32>
    %cst_34 = arith.constant 0.000000e+00 : f32
    %46 = vector.broadcast %cst_34 : f32 to vector<64x64xf32>
    %47 = arith.maximumf %45, %46 : vector<64x64xf32>
    %48 = arith.truncf %47 : vector<64x64xf32> to vector<64x64xbf16>
    %c4 = arith.constant 4 : index
    %c0_35 = arith.constant 0 : index
    %c0_36 = arith.constant 0 : index
    %49 = vector.load %arg4[%c4, %c0_35, %c0_36] : memref<6x64x64xbf16, #tpu.memory_space<vmem>>, vector<1x64x64xbf16>
    %50 = vector.shape_cast %49 : vector<1x64x64xbf16> to vector<64x64xbf16>
    %cst_37 = arith.constant dense<0.000000e+00> : vector<64x64xf32>
    %51 = tpu.matmul %48, %50, %cst_37 {dimension_numbers = #tpu.dot_dimension_numbers<[1], [0], [0], [1], [0, 0, 1, 1], [], []>} : vector<64x64xbf16>, vector<64x64xbf16>, vector<64x64xf32> -> vector<64x64xf32>
    %c4_38 = arith.constant 4 : index
    %c0_39 = arith.constant 0 : index
    %c0_40 = arith.constant 0 : index
    %52 = vector.load %arg5[%c4_38, %c0_39, %c0_40] : memref<6x1x64xf32, #tpu.memory_space<vmem>>, vector<1x1x64xf32>
    %53 = vector.shape_cast %52 : vector<1x1x64xf32> to vector<1x64xf32>
    %54 = vector.broadcast %53 : vector<1x64xf32> to vector<64x64xf32>
    %55 = arith.addf %51, %54 : vector<64x64xf32>
    %cst_41 = arith.constant 0.000000e+00 : f32
    %56 = vector.broadcast %cst_41 : f32 to vector<64x64xf32>
    %57 = arith.maximumf %55, %56 : vector<64x64xf32>
    %58 = arith.truncf %57 : vector<64x64xf32> to vector<64x64xbf16>
    %c5 = arith.constant 5 : index
    %c0_42 = arith.constant 0 : index
    %c0_43 = arith.constant 0 : index
    %59 = vector.load %arg4[%c5, %c0_42, %c0_43] : memref<6x64x64xbf16, #tpu.memory_space<vmem>>, vector<1x64x64xbf16>
    %60 = vector.shape_cast %59 : vector<1x64x64xbf16> to vector<64x64xbf16>
    %cst_44 = arith.constant dense<0.000000e+00> : vector<64x64xf32>
    %61 = tpu.matmul %58, %60, %cst_44 {dimension_numbers = #tpu.dot_dimension_numbers<[1], [0], [0], [1], [0, 0, 1, 1], [], []>} : vector<64x64xbf16>, vector<64x64xbf16>, vector<64x64xf32> -> vector<64x64xf32>
    %c5_45 = arith.constant 5 : index
    %c0_46 = arith.constant 0 : index
    %c0_47 = arith.constant 0 : index
    %62 = vector.load %arg5[%c5_45, %c0_46, %c0_47] : memref<6x1x64xf32, #tpu.memory_space<vmem>>, vector<1x1x64xf32>
    %63 = vector.shape_cast %62 : vector<1x1x64xf32> to vector<1x64xf32>
    %64 = vector.broadcast %63 : vector<1x64xf32> to vector<64x64xf32>
    %65 = arith.addf %61, %64 : vector<64x64xf32>
    %cst_48 = arith.constant 0.000000e+00 : f32
    %66 = vector.broadcast %cst_48 : f32 to vector<64x64xf32>
    %67 = arith.maximumf %65, %66 : vector<64x64xf32>
    %68 = arith.truncf %67 : vector<64x64xf32> to vector<64x64xbf16>
    %c0_49 = arith.constant 0 : index
    %c0_50 = arith.constant 0 : index
    %69 = vector.load %arg6[%c0_49, %c0_50] : memref<64x128xbf16, #tpu.memory_space<vmem>>, vector<64x128xbf16>
    %cst_51 = arith.constant dense<0.000000e+00> : vector<64x128xf32>
    %70 = tpu.matmul %68, %69, %cst_51 {dimension_numbers = #tpu.dot_dimension_numbers<[1], [0], [0], [1], [0, 0, 1, 1], [], []>} : vector<64x64xbf16>, vector<64x128xbf16>, vector<64x128xf32> -> vector<64x128xf32>
    %c0_52 = arith.constant 0 : index
    %c0_53 = arith.constant 0 : index
    %71 = vector.load %arg7[%c0_52, %c0_53] : memref<1x128xf32, #tpu.memory_space<vmem>>, vector<1x128xf32>
    %72 = vector.broadcast %71 : vector<1x128xf32> to vector<64x128xf32>
    %73 = arith.addf %70, %72 : vector<64x128xf32>
    %cst_54 = arith.constant dense<0xFF800000> : vector<64xf32>
    %74 = vector.multi_reduction <maximumf>, %73, %cst_54 [1] : vector<64x128xf32> to vector<64xf32>
    %75 = vector.shape_cast %74 : vector<64xf32> to vector<64x1xf32>
    %76 = vector.broadcast %75 : vector<64x1xf32> to vector<64x128xf32>
    %77 = arith.subf %73, %76 : vector<64x128xf32>
    %78 = math.exp %77 : vector<64x128xf32>
    %cst_55 = arith.constant dense<0.000000e+00> : vector<64xf32>
    %79 = vector.multi_reduction <add>, %78, %cst_55 [1] : vector<64x128xf32> to vector<64xf32>
    %80 = vector.shape_cast %79 : vector<64xf32> to vector<64x1xf32>
    %81 = math.log %80 : vector<64x1xf32>
    %82 = vector.broadcast %81 : vector<64x1xf32> to vector<64x128xf32>
    %83 = arith.subf %77, %82 : vector<64x128xf32>
    %c0_56 = arith.constant 0 : index
    %c0_57 = arith.constant 0 : index
    %84 = vector.load %arg8[%c0_56, %c0_57] : memref<64x128xf32, #tpu.memory_space<vmem>>, vector<64x128xf32>
    tpu.vector_store %arg8[%c0_56, %c0_57], %83 {strides = array<i32>} : memref<64x128xf32, #tpu.memory_space<vmem>>, vector<64x128xf32>,
    return
  }
  func.func @transform_0(%arg0: i32) -> (i32, i32) {
    %c0_i32 = arith.constant 0 : i32
    %c0_i32_0 = arith.constant 0 : i32
    return %arg0, %c0_i32 : i32, i32
  }
  func.func @transform_1(%arg0: i32) -> (i32, i32) {
    %c0_i32 = arith.constant 0 : i32
    %c0_i32_0 = arith.constant 0 : i32
    %c0_i32_1 = arith.constant 0 : i32
    return %c0_i32, %c0_i32_0 : i32, i32
  }
  func.func @transform_2(%arg0: i32) -> (i32, i32) {
    %c0_i32 = arith.constant 0 : i32
    %c0_i32_0 = arith.constant 0 : i32
    %c0_i32_1 = arith.constant 0 : i32
    return %c0_i32, %c0_i32_0 : i32, i32
  }
  func.func @transform_3(%arg0: i32) -> (i32, i32, i32) {
    %c0_i32 = arith.constant 0 : i32
    %c0_i32_0 = arith.constant 0 : i32
    %c0_i32_1 = arith.constant 0 : i32
    %c0_i32_2 = arith.constant 0 : i32
    return %c0_i32, %c0_i32_0, %c0_i32_1 : i32, i32, i32
  }
  func.func @transform_4(%arg0: i32) -> (i32, i32, i32) {
    %c0_i32 = arith.constant 0 : i32
    %c0_i32_0 = arith.constant 0 : i32
    %c0_i32_1 = arith.constant 0 : i32
    %c0_i32_2 = arith.constant 0 : i32
    return %c0_i32, %c0_i32_0, %c0_i32_1 : i32, i32, i32
  }
  func.func @transform_5(%arg0: i32) -> (i32, i32) {
    %c0_i32 = arith.constant 0 : i32
    %c0_i32_0 = arith.constant 0 : i32
    %c0_i32_1 = arith.constant 0 : i32
    return %c0_i32, %c0_i32_0 : i32, i32
  }
  func.func @transform_6(%arg0: i32) -> (i32, i32) {
    %c0_i32 = arith.constant 0 : i32
    %c0_i32_0 = arith.constant 0 : i32
    %c0_i32_1 = arith.constant 0 : i32
    return %c0_i32, %c0_i32_0 : i32, i32
  }
  func.func @transform_7(%arg0: i32) -> (i32, i32) {
    %c0_i32 = arith.constant 0 : i32
    %c0_i32_0 = arith.constant 0 : i32
    return %arg0, %c0_i32 : i32, i32
  }
}

</mosaic_0001>

<llo_original>
// kernel: encoder_bn.1
$region0: #{encoder_bn.1}
  #allocation0 [shape = 'u32[]', space=smem, size = 0x4, offset = 0x4, fixed_abs, tag = 'smem constant byte address 0x4 - core index']
  #allocation1 [shape = 'u32[144,128]{1,0:T(1,128)}', space=vmem, size = 0x12000, scoped, tag = 'internal scratch']
  %s0 = inlined_call_operand.vmem [shape: bf16[128,64], index: 0, kind: input, shape index: {}]
  %s1 = inlined_call_operand.vmem [shape: bf16[64,64], index: 1, kind: input, shape index: {}]
  %s2 = inlined_call_operand.vmem [shape: f32[1,64], index: 2, kind: input, shape index: {}]
  %s3 = inlined_call_operand.vmem [shape: bf16[6,64,64], index: 3, kind: input, shape index: {}]
  %s4 = inlined_call_operand.vmem [shape: f32[6,1,64], index: 4, kind: input, shape index: {}]
  %s5 = inlined_call_operand.vmem [shape: bf16[64,128], index: 5, kind: input, shape index: {}]
  %s6 = inlined_call_operand.vmem [shape: f32[1,128], index: 6, kind: input, shape index: {}]
  %s7 = inlined_call_operand.hbm [shape: f32[128,128], index: 7, kind: output, shape index: {}]
  %s8 = sld [smem:[#allocation0]]
  $region61: #{encoder_bn.1} parent=0
    _
  %s10 = ssub.s32 1, %s8
  %s11 = scalar_select 0, %s10, %s8
  $region1: #{encoder_bn.1} parent=0
    #allocation2 [shape = 'u8[65536]{0}', space=vmem, size = 0x10000, scoped, tag = 'output window, operand 0']
    #allocation3 [shape = 's32[2]{0}', space=sflag, size = 0x8, scoped, tag = 'scoped memory for encoder_bn.1']
    %12 = vsyncpa [#allocation3], 0
    %s13 = scalar_lea.sflag [#allocation3], 1
    %14 = vsyncpa %s13, 0
    loop: start=0, step=1, limit=4
    $region2: #{encoder_bn.1} parent=1 // loop_pre_header
      _
    $region3: #{encoder_bn.1} parent=1 // loop_header
      %s16 = sphi 0, %s20
      %p17 = scmp.ge.s32.totalorder %s16, 4
      %s26 = sphi 0, %s28
      %s29 = sphi 0, %s26
      %s30 = sphi 0, %s29
      %s46 = sphi 0, %s30
      %s50 = sphi 0, %s50
      %s52 = sphi 0, %s50
      %s53 = sphi 0, %s52
      %s67 = sphi 0, %s53
      %s71 = sphi 0, %s71
      %s73 = sphi 0, %s71
      %s74 = sphi 0, %s73
      %s88 = sphi 0, %s74
      %s92 = sphi 0, %s92
      %s94 = sphi 0, %s92
      %s95 = sphi 0, %s94
      %s109 = sphi 0, %s95
      %s113 = sphi 0, %s113
      %s115 = sphi 0, %s113
      %s116 = sphi 0, %s115
      %s130 = sphi 0, %s116
      %s134 = sphi 0, %s134
      %s136 = sphi 0, %s134
      %s137 = sphi 0, %s136
      %s151 = sphi 0, %s137
      %s155 = sphi 0, %s155
      %s157 = sphi 0, %s155
      %s158 = sphi 0, %s157
      %s172 = sphi 0, %s158
      %s178 = sphi 0, %s180
      %s181 = sphi 0, %s178
      %s182 = sphi 0, %s181
      %s198 = sphi 0, %s182
    $region4: #{encoder_bn.1} parent=1 // loop_header_branch
      %19 = sbr.rel (%p17) target = $region8
    $region5: #{encoder_bn.1} parent=1 // loop_body
      %s21 = ssub.s32 %s16, 1
      %s22 = ssub.s32 %s16, 2
      %s23 = sadd.s32 %s16, 1
      %s24 = ssub.s32 %s16, %s23
      %p25 = scmp.eq.s32.totalorder %s24, 0
      %s27 = sadd.s32 %s26, 1
      %s28 = scalar_select %p25, %s26, %s27
      %p31 = pneg %p25
      %p32 = scmp.eq.s32.totalorder %s16, 1
      %p33 = por %p31, %p32
      %p34 = scmp.ne.s32.totalorder %s26, %s29
      %p35 = scmp.eq.s32.totalorder %s16, 0
      %p36 = por %p34, %p35
      %p37 = scmp.ne.s32.totalorder %s26, %s29
      %p38 = scmp.eq.s32.totalorder %s21, 1
      %p39 = por %p37, %p38
      %p40 = scmp.ne.s32.totalorder %s29, %s30
      %p41 = scmp.eq.s32.totalorder %s21, 0
      %p42 = por %p40, %p41
      %p43 = scmp.ne.s32.totalorder %s29, %s30
      %p44 = scmp.eq.s32.totalorder %s22, 1
      %p45 = por %p43, %p44
      %p47 = scmp.ne.s32.totalorder %s30, %s46
      %p48 = scmp.eq.s32.totalorder %s22, 0
      %p49 = por %p47, %p48
      %s51 = sadd.s32 %s50, 1
      %p54 = scmp.eq.s32.totalorder %s16, 1
      %p55 = scmp.ne.s32.totalorder %s50, %s52
      %p56 = scmp.eq.s32.totalorder %s16, 0
      %p57 = por %p55, %p56
      %p58 = scmp.ne.s32.totalorder %s50, %s52
      %p59 = scmp.eq.s32.totalorder %s21, 1
      %p60 = por %p58, %p59
      %p61 = scmp.ne.s32.totalorder %s52, %s53
      %p62 = scmp.eq.s32.totalorder %s21, 0
      %p63 = por %p61, %p62
      %p64 = scmp.ne.s32.totalorder %s52, %s53
      %p65 = scmp.eq.s32.totalorder %s22, 1
      %p66 = por %p64, %p65
      %p68 = scmp.ne.s32.totalorder %s53, %s67
      %p69 = scmp.eq.s32.totalorder %s22, 0
      %p70 = por %p68, %p69
      %s72 = sadd.s32 %s71, 1
      %p75 = scmp.eq.s32.totalorder %s16, 1
      %p76 = scmp.ne.s32.totalorder %s71, %s73
      %p77 = scmp.eq.s32.totalorder %s16, 0
      %p78 = por %p76, %p77
      %p79 = scmp.ne.s32.totalorder %s71, %s73
      %p80 = scmp.eq.s32.totalorder %s21, 1
      %p81 = por %p79, %p80
      %p82 = scmp.ne.s32.totalorder %s73, %s74
      %p83 = scmp.eq.s32.totalorder %s21, 0
      %p84 = por %p82, %p83
      %p85 = scmp.ne.s32.totalorder %s73, %s74
      %p86 = scmp.eq.s32.totalorder %s22, 1
      %p87 = por %p85, %p86
      %p89 = scmp.ne.s32.totalorder %s74, %s88
      %p90 = scmp.eq.s32.totalorder %s22, 0
      %p91 = por %p89, %p90
      %s93 = sadd.s32 %s92, 1
      %p96 = scmp.eq.s32.totalorder %s16, 1
      %p97 = scmp.ne.s32.totalorder %s92, %s94
      %p98 = scmp.eq.s32.totalorder %s16, 0
      %p99 = por %p97, %p98
      %p100 = scmp.ne.s32.totalorder %s92, %s94
      %p101 = scmp.eq.s32.totalorder %s21, 1
      %p102 = por %p100, %p101
      %p103 = scmp.ne.s32.totalorder %s94, %s95
      %p104 = scmp.eq.s32.totalorder %s21, 0
      %p105 = por %p103, %p104
      %p106 = scmp.ne.s32.totalorder %s94, %s95
      %p107 = scmp.eq.s32.totalorder %s22, 1
      %p108 = por %p106, %p107
      %p110 = scmp.ne.s32.totalorder %s95, %s109
      %p111 = scmp.eq.s32.totalorder %s22, 0
      %p112 = por %p110, %p111
      %s114 = sadd.s32 %s113, 1
      %p117 = scmp.eq.s32.totalorder %s16, 1
      %p118 = scmp.ne.s32.totalorder %s113, %s115
      %p119 = scmp.eq.s32.totalorder %s16, 0
      %p120 = por %p118, %p119
      %p121 = scmp.ne.s32.totalorder %s113, %s115
      %p122 = scmp.eq.s32.totalorder %s21, 1
      %p123 = por %p121, %p122
      %p124 = scmp.ne.s32.totalorder %s115, %s116
      %p125 = scmp.eq.s32.totalorder %s21, 0
      %p126 = por %p124, %p125
      %p127 = scmp.ne.s32.totalorder %s115, %s116
      %p128 = scmp.eq.s32.totalorder %s22, 1
      %p129 = por %p127, %p128
      %p131 = scmp.ne.s32.totalorder %s116, %s130
      %p132 = scmp.eq.s32.totalorder %s22, 0
      %p133 = por %p131, %p132
      %s135 = sadd.s32 %s134, 1
      %p138 = scmp.eq.s32.totalorder %s16, 1
      %p139 = scmp.ne.s32.totalorder %s134, %s136
      %p140 = scmp.eq.s32.totalorder %s16, 0
      %p141 = por %p139, %p140
      %p142 = scmp.ne.s32.totalorder %s134, %s136
      %p143 = scmp.eq.s32.totalorder %s21, 1
      %p144 = por %p142, %p143
      %p145 = scmp.ne.s32.totalorder %s136, %s137
      %p146 = scmp.eq.s32.totalorder %s21, 0
      %p147 = por %p145, %p146
      %p148 = scmp.ne.s32.totalorder %s136, %s137
      %p149 = scmp.eq.s32.totalorder %s22, 1
      %p150 = por %p148, %p149
      %p152 = scmp.ne.s32.totalorder %s137, %s151
      %p153 = scmp.eq.s32.totalorder %s22, 0
      %p154 = por %p152, %p153
      %s156 = sadd.s32 %s155, 1
      %p159 = scmp.eq.s32.totalorder %s16, 1
      %p160 = scmp.ne.s32.totalorder %s155, %s157
      %p161 = scmp.eq.s32.totalorder %s16, 0
      %p162 = por %p160, %p161
      %p163 = scmp.ne.s32.totalorder %s155, %s157
      %p164 = scmp.eq.s32.totalorder %s21, 1
      %p165 = por %p163, %p164
      %p166 = scmp.ne.s32.totalorder %s157, %s158
      %p167 = scmp.eq.s32.totalorder %s21, 0
      %p168 = por %p166, %p167
      %p169 = scmp.ne.s32.totalorder %s157, %s158
      %p170 = scmp.eq.s32.totalorder %s22, 1
      %p171 = por %p169, %p170
      %p173 = scmp.ne.s32.totalorder %s158, %s172
      %p174 = scmp.eq.s32.totalorder %s22, 0
      %p175 = por %p173, %p174
      %s176 = ssub.s32 %s16, %s23
      %p177 = scmp.eq.s32.totalorder %s176, 0
      %s179 = sadd.s32 %s178, 1
      %s180 = scalar_select %p177, %s178, %s179
      %p183 = pneg %p177
      %p184 = scmp.eq.s32.totalorder %s16, 1
      %p185 = por %p183, %p184
      %p186 = scmp.ne.s32.totalorder %s178, %s181
      %p187 = scmp.eq.s32.totalorder %s16, 0
      %p188 = por %p186, %p187
      %p189 = scmp.ne.s32.totalorder %s178, %s181
      %p190 = scmp.eq.s32.totalorder %s21, 1
      %p191 = por %p189, %p190
      %p192 = scmp.ne.s32.totalorder %s181, %s182
      %p193 = scmp.eq.s32.totalorder %s21, 0
      %p194 = por %p192, %p193
      %p195 = scmp.ne.s32.totalorder %s181, %s182
      %p196 = scmp.eq.s32.totalorder %s22, 1
      %p197 = por %p195, %p196
      %p199 = scmp.ne.s32.totalorder %s182, %s198
      %p200 = scmp.eq.s32.totalorder %s22, 0
      %p201 = por %p199, %p200
      %p202 = scmp.le.s32.totalorder 1, %s16
      %p203 = scmp.lt.s32.totalorder %s16, 3
      %p204 = pnand %p202, %p203
      %p205 = pneg %p204
      // Predicated region
      $region9: #{encoder_bn.1} parent=5 // pred_check
        _
      $region10: #{encoder_bn.1} parent=5 // pred_check_branch
        %207 = sbr.rel (%p204) target = $region12
      $region11: #{encoder_bn.1} parent=5 // pred_region
        %s208 = ssub.s32 %s16, 1
        // Predicated region
        $region13: #{encoder_bn.1} parent=11 // pred_check
          %p209 = pneg %p63
        $region14: #{encoder_bn.1} parent=11 // pred_check_branch
          %211 = sbr.rel (%p209) target = $region16
        $region15: #{encoder_bn.1} parent=11 // pred_region
          _
        $region16: #{encoder_bn.1} parent=11 // pred_fallthru
          _
        // Predicated region
        $region17: #{encoder_bn.1} parent=11 // pred_check
          %p212 = pneg %p84
        $region18: #{encoder_bn.1} parent=11 // pred_check_branch
          %214 = sbr.rel (%p212) target = $region20
        $region19: #{encoder_bn.1} parent=11 // pred_region
          _
        $region20: #{encoder_bn.1} parent=11 // pred_fallthru
          _
        // Predicated region
        $region21: #{encoder_bn.1} parent=11 // pred_check
          %p215 = pneg %p105
        $region22: #{encoder_bn.1} parent=11 // pred_check_branch
          %217 = sbr.rel (%p215) target = $region24
        $region23: #{encoder_bn.1} parent=11 // pred_region
          _
        $region24: #{encoder_bn.1} parent=11 // pred_fallthru
          _
        // Predicated region
        $region25: #{encoder_bn.1} parent=11 // pred_check
          %p218 = pneg %p126
        $region26: #{encoder_bn.1} parent=11 // pred_check_branch
          %220 = sbr.rel (%p218) target = $region28
        $region27: #{encoder_bn.1} parent=11 // pred_region
          _
        $region28: #{encoder_bn.1} parent=11 // pred_fallthru
          _
        // Predicated region
        $region29: #{encoder_bn.1} parent=11 // pred_check
          %p221 = pneg %p147
        $region30: #{encoder_bn.1} parent=11 // pred_check_branch
          %223 = sbr.rel (%p221) target = $region32
        $region31: #{encoder_bn.1} parent=11 // pred_region
          _
        $region32: #{encoder_bn.1} parent=11 // pred_fallthru
          _
        // Predicated region
        $region33: #{encoder_bn.1} parent=11 // pred_check
          %p224 = pneg %p168
        $region34: #{encoder_bn.1} parent=11 // pred_check_branch
          %226 = sbr.rel (%p224) target = $region36
        $region35: #{encoder_bn.1} parent=11 // pred_region
          _
        $region36: #{encoder_bn.1} parent=11 // pred_fallthru
          _
      $region12: #{encoder_bn.1} parent=5 // pred_fallthru
        _
      %p227 = scmp.lt.s32.totalorder %s16, 2
      // Predicated region
      $region37: #{encoder_bn.1} parent=5 // pred_check
        %p228 = pneg %p227
      $region38: #{encoder_bn.1} parent=5 // pred_check_branch
        %230 = sbr.rel (%p228) target = $region40
      $region39: #{encoder_bn.1} parent=5 // pred_region
        // Predicated region
        $region41: #{encoder_bn.1} parent=39 // pred_check
          %p231 = pneg %p36
        $region42: #{encoder_bn.1} parent=39 // pred_check_branch
          %233 = sbr.rel (%p231) target = $region44
        $region43: #{encoder_bn.1} parent=39 // pred_region
          %s234 = smul.u32 8, %s16
          %p235 = scmp.lt.s32.totalorder %s234, 15
          %s236 = scalar_select %p235, %s234, 15
          %s237 = smul.addr %s236, 4
          %s238 = scalar_lea.vmem %s0, %s237
          %s239 = smul.u32 8, %s16
        $region44: #{encoder_bn.1} parent=39 // pred_fallthru
          _
      $region40: #{encoder_bn.1} parent=5 // pred_fallthru
        _
      %p240 = scmp.le.s32.totalorder 1, %s16
      %p241 = scmp.lt.s32.totalorder %s16, 3
      %p242 = pnand %p240, %p241
      %p243 = pneg %p242
      // Predicated region
      $region45: #{encoder_bn.1} parent=5 // pred_check
        _
      $region46: #{encoder_bn.1} parent=5 // pred_check_branch
        %245 = sbr.rel (%p242) target = $region48
      $region47: #{encoder_bn.1} parent=5 // pred_region
        %s246 = ssub.s32 %s16, 1
        %s247 = smul.u32 8, %s21
        %p248 = scmp.lt.s32.totalorder %s247, 15
        %s249 = scalar_select %p248, %s247, 15
        %s250 = smul.addr %s249, 4
        %s251 = scalar_lea.vmem %s0, %s250
        %p252 = pneg %p42
        %p253 = pneg %p39
        %p254 = pneg %p63
        %p255 = pneg %p60
        %p256 = pneg %p84
        %p257 = pneg %p81
        %p258 = pneg %p105
        %p259 = pneg %p102
        %p260 = pneg %p126
        %p261 = pneg %p123
        %p262 = pneg %p147
        %p263 = pneg %p144
        %p264 = pneg %p168
        %p265 = pneg %p165
        %p266 = pneg %p194
        %p267 = pneg %p191
        %s268 = sand.u32 %s181, 1
        %s269 = scalar_lea.sflag [#allocation3], %s268
        %s270 = sand.u32 %s181, 1
        %s271 = smul.addr %s270, 64
        %s272 = scalar_lea.vmem [#allocation2], %s271
        %s273 = smul.u32 8, %s21
        %p274 = scmp.lt.s32.totalorder %s273, 15
        %s275 = scalar_select %p274, %s273, 15
        %s276 = smul.addr %s275, 4
        %s277 = scalar_lea.vmem %s0, %s276
        %s278 = smul.u32 8, %s21
        %s279 = smul.u32 8, %s21
        %v281 = vld [vmem:[%s277] sm:$0xf]
        %v282 = vld [vmem:[%s277 + $0x4] sm:$0xf]
        %v283 = vld [vmem:[%s277 + $0x8] sm:$0xf]
        %v284 = vld [vmem:[%s277 + $0xc] sm:$0xf]
        %v285 = vld [vmem:[%s277 + $0x10] sm:$0xf]
        %v286 = vld [vmem:[%s277 + $0x14] sm:$0xf]
        %v287 = vld [vmem:[%s277 + $0x18] sm:$0xf]
        %v288 = vld [vmem:[%s277 + $0x1c] sm:$0xf]
        %v289 = vld [vmem:[%s1] sm:$0xf]
        %v290 = vld [vmem:[%s1 + $0x4] sm:$0xf]
        %v291 = vld [vmem:[%s1 + $0x8] sm:$0xf]
        %v292 = vld [vmem:[%s1 + $0xc] sm:$0xf]
        %v293 = vld [vmem:[%s1 + $0x10] sm:$0xf]
        %v294 = vld [vmem:[%s1 + $0x14] sm:$0xf]
        %v295 = vld [vmem:[%s1 + $0x18] sm:$0xf]
        %v296 = vld [vmem:[%s1 + $0x1c] sm:$0xf]
        %v297 = vld [vmem:[%s2] sm:$0x1]
        %v299 = vlaneseq
        %v300 = vshrl.u32 %v299, 7
        %v301 = vsub.s32 0, %v300
        %v302 = vrot.slane %v297, %v301
        %v312 = vunpack.c.l.b16 %v281
        %v313 = vunpack.c.l.b16 %v282
        %v314 = vunpack.c.l.b16 %v283
        %v315 = vunpack.c.l.b16 %v284
        %v316 = vunpack.c.l.b16 %v285
        %v317 = vunpack.c.l.b16 %v286
        %v318 = vunpack.c.l.b16 %v287
        %v319 = vunpack.c.l.b16 %v288
        %v320 = vpack.c.b16 %v313, %v312
        %v321 = vpack.c.b16 %v315, %v314
        %v322 = vpack.c.b16 %v317, %v316
        %v323 = vpack.c.b16 %v319, %v318
        %v332 = vunpack.c.l.b16 %v289
        %v333 = vunpack.c.l.b16 %v290
        %v334 = vunpack.c.l.b16 %v291
        %v335 = vunpack.c.l.b16 %v292
        %v336 = vunpack.c.l.b16 %v293
        %v337 = vunpack.c.l.b16 %v294
        %v338 = vunpack.c.l.b16 %v295
        %v339 = vunpack.c.l.b16 %v296
        %v340 = vpack.c.b16 %v333, %v332
        %v341 = vpack.c.b16 %v335, %v334
        %v342 = vpack.c.b16 %v337, %v336
        %v343 = vpack.c.b16 %v339, %v338
        %vm348 = vcmask 523264
        %v350 = vsel %vm348, %v320, 0
        %v353 = vsel %vm348, %v321, 0
        %v356 = vsel %vm348, %v322, 0
        %v359 = vsel %vm348, %v323, 0
        %361 = vmatprep.subr.bf16.mxu0 0
        %362 = vmatpush1.bf16.msra.mxu0 %v340
        %363 = vmatprep.subr.bf16.mxu0 0
        %364 = vmatpush1.bf16.msra.mxu0 %v341
        %365 = vmatprep.subr.bf16.mxu0 0
        %366 = vmatpush1.bf16.msra.mxu0 %v342
        %367 = vmatprep.subr.bf16.mxu0 0
        %368 = vmatpush1.bf16.msra.mxu0 %v343
        %369 = vmatprep.subr.bf16.mxu0 0
        %370 = vmatpush1.bf16.msra.mxu0 0
        %371 = vmatprep.subr.bf16.mxu0 0
        %372 = vmatpush1.bf16.msra.mxu0 0
        %373 = vmatprep.subr.bf16.mxu0 0
        %374 = vmatpush1.bf16.msra.mxu0 0
        %375 = vmatprep.subr.bf16.mxu0 0
        %376 = vmatpush1.bf16.msra.mxu0 0
        %377 = vmatprep.subr.bf16.mxu0 0
        %378 = vmatpush1.bf16.msra.mxu0 0
        %379 = vmatprep.subr.bf16.mxu0 0
        %380 = vmatpush1.bf16.msra.mxu0 0
        %381 = vmatprep.subr.bf16.mxu0 0
        %382 = vmatpush1.bf16.msra.mxu0 0
        %383 = vmatprep.subr.bf16.mxu0 0
        %384 = vmatpush1.bf16.msra.mxu0 0
        %385 = vmatprep.subr.bf16.mxu0 0
        %386 = vmatpush1.bf16.msra.mxu0 0
        %387 = vmatprep.subr.bf16.mxu0 0
        %388 = vmatpush1.bf16.msra.mxu0 0
        %389 = vmatprep.subr.bf16.mxu0 0
        %390 = vmatpush1.bf16.msra.mxu0 0
        %391 = vmatprep.subr.bf16.mxu0 0
        %392 = vmatpush1.bf16.msra.mxu0 0
        %393 = vmatprep.mubr.bf16.mxu0 0
        %394 = vmatmul.mubr.bf16.gmra.mrb[0].mxu0 %v350
        %v395 = vpop.f32.mrb[0].mxu0
        %v396 = vadd.f32 %v302, %v395
        %v397 = vpop.f32.mrb[0].mxu0
        %v398 = vpop.f32.mrb[0].mxu0
        %v399 = vadd.f32 %v302, %v398
        %v400 = vpop.f32.mrb[0].mxu0
        %401 = vmatprep.mubr.bf16.mxu0 0
        %402 = vmatmul.mubr.bf16.gmra.mrb[0].mxu0 %v353
        %v403 = vpop.f32.mrb[0].mxu0
        %v404 = vadd.f32 %v302, %v403
        %v405 = vpop.f32.mrb[0].mxu0
        %v406 = vpop.f32.mrb[0].mxu0
        %v407 = vadd.f32 %v302, %v406
        %v408 = vpop.f32.mrb[0].mxu0
        %409 = vmatprep.mubr.bf16.mxu0 0
        %410 = vmatmul.mubr.bf16.gmra.mrb[0].mxu0 %v356
        %v411 = vpop.f32.mrb[0].mxu0
        %v412 = vadd.f32 %v302, %v411
        %v413 = vpop.f32.mrb[0].mxu0
        %v414 = vpop.f32.mrb[0].mxu0
        %v415 = vadd.f32 %v302, %v414
        %v416 = vpop.f32.mrb[0].mxu0
        %417 = vmatprep.mubr.bf16.mxu0 0
        %418 = vmatmul.mubr.bf16.gmra.mrb[0].mxu0 %v359
        %v419 = vpop.f32.mrb[0].mxu0
        %v420 = vadd.f32 %v302, %v419
        %v421 = vpop.f32.mrb[0].mxu0
        %v422 = vpop.f32.mrb[0].mxu0
        %v423 = vadd.f32 %v302, %v422
        %v424 = vpop.f32.mrb[0].mxu0
        %425 = vdwg.mxu0
        %v426 = vmax.f32 %v396, 0.0
        %v427 = vmax.f32 %v399, 0.0
        %v428 = vmax.f32 %v404, 0.0
        %v429 = vmax.f32 %v407, 0.0
        %v430 = vmax.f32 %v412, 0.0
        %v431 = vmax.f32 %v415, 0.0
        %v432 = vmax.f32 %v420, 0.0
        %v433 = vmax.f32 %v423, 0.0
        %v434 = vpack.c.bf16 %v427, %v426
        %v435 = vpack.c.bf16 %v429, %v428
        %v436 = vpack.c.bf16 %v431, %v430
        %v437 = vpack.c.bf16 %v433, %v432
        %v438 = vld [vmem:[%s3] sm:$0xf]
        %v439 = vld [vmem:[%s3 + $0x4] sm:$0xf]
        %v440 = vld [vmem:[%s3 + $0x8] sm:$0xf]
        %v441 = vld [vmem:[%s3 + $0xc] sm:$0xf]
        %v442 = vld [vmem:[%s3 + $0x10] sm:$0xf]
        %v443 = vld [vmem:[%s3 + $0x14] sm:$0xf]
        %v444 = vld [vmem:[%s3 + $0x18] sm:$0xf]
        %v445 = vld [vmem:[%s3 + $0x1c] sm:$0xf]
        %v446 = vld [vmem:[%s4] sm:$0x1]
        %v448 = vlaneseq
        %v449 = vshrl.u32 %v448, 7
        %v450 = vsub.s32 0, %v449
        %v451 = vrot.slane %v446, %v450
        %v461 = vunpack.c.l.b16 %v438
        %v462 = vunpack.c.l.b16 %v439
        %v463 = vunpack.c.l.b16 %v440
        %v464 = vunpack.c.l.b16 %v441
        %v465 = vunpack.c.l.b16 %v442
        %v466 = vunpack.c.l.b16 %v443
        %v467 = vunpack.c.l.b16 %v444
        %v468 = vunpack.c.l.b16 %v445
        %v469 = vpack.c.b16 %v462, %v461
        %v470 = vpack.c.b16 %v464, %v463
        %v471 = vpack.c.b16 %v466, %v465
        %v472 = vpack.c.b16 %v468, %v467
        %v478 = vsel %vm348, %v434, 0
        %v481 = vsel %vm348, %v435, 0
        %v484 = vsel %vm348, %v436, 0
        %v487 = vsel %vm348, %v437, 0
        %489 = vmatprep.subr.bf16.mxu0 0
        %490 = vmatpush1.bf16.msra.mxu0 %v469
        %491 = vmatprep.subr.bf16.mxu0 0
        %492 = vmatpush1.bf16.msra.mxu0 %v470
        %493 = vmatprep.subr.bf16.mxu0 0
        %494 = vmatpush1.bf16.msra.mxu0 %v471
        %495 = vmatprep.subr.bf16.mxu0 0
        %496 = vmatpush1.bf16.msra.mxu0 %v472
        %497 = vmatprep.subr.bf16.mxu0 0
        %498 = vmatpush1.bf16.msra.mxu0 0
        %499 = vmatprep.subr.bf16.mxu0 0
        %500 = vmatpush1.bf16.msra.mxu0 0
        %501 = vmatprep.subr.bf16.mxu0 0
        %502 = vmatpush1.bf16.msra.mxu0 0
        %503 = vmatprep.subr.bf16.mxu0 0
        %504 = vmatpush1.bf16.msra.mxu0 0
        %505 = vmatprep.subr.bf16.mxu0 0
        %506 = vmatpush1.bf16.msra.mxu0 0
        %507 = vmatprep.subr.bf16.mxu0 0
        %508 = vmatpush1.bf16.msra.mxu0 0
        %509 = vmatprep.subr.bf16.mxu0 0
        %510 = vmatpush1.bf16.msra.mxu0 0
        %511 = vmatprep.subr.bf16.mxu0 0
        %512 = vmatpush1.bf16.msra.mxu0 0
        %513 = vmatprep.subr.bf16.mxu0 0
        %514 = vmatpush1.bf16.msra.mxu0 0
        %515 = vmatprep.subr.bf16.mxu0 0
        %516 = vmatpush1.bf16.msra.mxu0 0
        %517 = vmatprep.subr.bf16.mxu0 0
        %518 = vmatpush1.bf16.msra.mxu0 0
        %519 = vmatprep.subr.bf16.mxu0 0
        %520 = vmatpush1.bf16.msra.mxu0 0
        %521 = vmatprep.mubr.bf16.mxu0 0
        %522 = vmatmul.mubr.bf16.gmra.mrb[0].mxu0 %v478
        %v523 = vpop.f32.mrb[0].mxu0
        %v524 = vadd.f32 %v451, %v523
        %v525 = vpop.f32.mrb[0].mxu0
        %v526 = vpop.f32.mrb[0].mxu0
        %v527 = vadd.f32 %v451, %v526
        %v528 = vpop.f32.mrb[0].mxu0
        %529 = vmatprep.mubr.bf16.mxu0 0
        %530 = vmatmul.mubr.bf16.gmra.mrb[0].mxu0 %v481
        %v531 = vpop.f32.mrb[0].mxu0
        %v532 = vadd.f32 %v451, %v531
        %v533 = vpop.f32.mrb[0].mxu0
        %v534 = vpop.f32.mrb[0].mxu0
        %v535 = vadd.f32 %v451, %v534
        %v536 = vpop.f32.mrb[0].mxu0
        %537 = vmatprep.mubr.bf16.mxu0 0
        %538 = vmatmul.mubr.bf16.gmra.mrb[0].mxu0 %v484
        %v539 = vpop.f32.mrb[0].mxu0
        %v540 = vadd.f32 %v451, %v539
        %v541 = vpop.f32.mrb[0].mxu0
        %v542 = vpop.f32.mrb[0].mxu0
        %v543 = vadd.f32 %v451, %v542
        %v544 = vpop.f32.mrb[0].mxu0
        %545 = vmatprep.mubr.bf16.mxu0 0
        %546 = vmatmul.mubr.bf16.gmra.mrb[0].mxu0 %v487
        %v547 = vpop.f32.mrb[0].mxu0
        %v548 = vadd.f32 %v451, %v547
        %v549 = vpop.f32.mrb[0].mxu0
        %v550 = vpop.f32.mrb[0].mxu0
        %v551 = vadd.f32 %v451, %v550
        %v552 = vpop.f32.mrb[0].mxu0
        %553 = vdwg.mxu0
        %v554 = vmax.f32 %v524, 0.0
        %v555 = vmax.f32 %v527, 0.0
        %v556 = vmax.f32 %v532, 0.0
        %v557 = vmax.f32 %v535, 0.0
        %v558 = vmax.f32 %v540, 0.0
        %v559 = vmax.f32 %v543, 0.0
        %v560 = vmax.f32 %v548, 0.0
        %v561 = vmax.f32 %v551, 0.0
        %v562 = vpack.c.bf16 %v555, %v554
        %v563 = vpack.c.bf16 %v557, %v556
        %v564 = vpack.c.bf16 %v559, %v558
        %v565 = vpack.c.bf16 %v561, %v560
        %s566 = scalar_lea.vmem %s3, 32
        %v567 = vld [vmem:[%s566] sm:$0xf]
        %v568 = vld [vmem:[%s566 + $0x4] sm:$0xf]
        %v569 = vld [vmem:[%s566 + $0x8] sm:$0xf]
        %v570 = vld [vmem:[%s566 + $0xc] sm:$0xf]
        %v571 = vld [vmem:[%s566 + $0x10] sm:$0xf]
        %v572 = vld [vmem:[%s566 + $0x14] sm:$0xf]
        %v573 = vld [vmem:[%s566 + $0x18] sm:$0xf]
        %v574 = vld [vmem:[%s566 + $0x1c] sm:$0xf]
        %s575 = scalar_lea.vmem %s4, 1
        %v576 = vld [vmem:[%s575] sm:$0x1]
        %v578 = vlaneseq
        %v579 = vshrl.u32 %v578, 7
        %v580 = vsub.s32 0, %v579
        %v581 = vrot.slane %v576, %v580
        %v591 = vunpack.c.l.b16 %v567
        %v592 = vunpack.c.l.b16 %v568
        %v593 = vunpack.c.l.b16 %v569
        %v594 = vunpack.c.l.b16 %v570
        %v595 = vunpack.c.l.b16 %v571
        %v596 = vunpack.c.l.b16 %v572
        %v597 = vunpack.c.l.b16 %v573
        %v598 = vunpack.c.l.b16 %v574
        %v599 = vpack.c.b16 %v592, %v591
        %v600 = vpack.c.b16 %v594, %v593
        %v601 = vpack.c.b16 %v596, %v595
        %v602 = vpack.c.b16 %v598, %v597
        %v608 = vsel %vm348, %v562, 0
        %v611 = vsel %vm348, %v563, 0
        %v614 = vsel %vm348, %v564, 0
        %v617 = vsel %vm348, %v565, 0
        %619 = vmatprep.subr.bf16.mxu0 0
        %620 = vmatpush1.bf16.msra.mxu0 %v599
        %621 = vmatprep.subr.bf16.mxu0 0
        %622 = vmatpush1.bf16.msra.mxu0 %v600
        %623 = vmatprep.subr.bf16.mxu0 0
        %624 = vmatpush1.bf16.msra.mxu0 %v601
        %625 = vmatprep.subr.bf16.mxu0 0
        %626 = vmatpush1.bf16.msra.mxu0 %v602
        %627 = vmatprep.subr.bf16.mxu0 0
        %628 = vmatpush1.bf16.msra.mxu0 0
        %629 = vmatprep.subr.bf16.mxu0 0
        %630 = vmatpush1.bf16.msra.mxu0 0
        %631 = vmatprep.subr.bf16.mxu0 0
        %632 = vmatpush1.bf16.msra.mxu0 0
        %633 = vmatprep.subr.bf16.mxu0 0
        %634 = vmatpush1.bf16.msra.mxu0 0
        %635 = vmatprep.subr.bf16.mxu0 0
        %636 = vmatpush1.bf16.msra.mxu0 0
        %637 = vmatprep.subr.bf16.mxu0 0
        %638 = vmatpush1.bf16.msra.mxu0 0
        %639 = vmatprep.subr.bf16.mxu0 0
        %640 = vmatpush1.bf16.msra.mxu0 0
        %641 = vmatprep.subr.bf16.mxu0 0
        %642 = vmatpush1.bf16.msra.mxu0 0
        %643 = vmatprep.subr.bf16.mxu0 0
        %644 = vmatpush1.bf16.msra.mxu0 0
        %645 = vmatprep.subr.bf16.mxu0 0
        %646 = vmatpush1.bf16.msra.mxu0 0
        %647 = vmatprep.subr.bf16.mxu0 0
        %648 = vmatpush1.bf16.msra.mxu0 0
        %649 = vmatprep.subr.bf16.mxu0 0
        %650 = vmatpush1.bf16.msra.mxu0 0
        %651 = vmatprep.mubr.bf16.mxu0 0
        %652 = vmatmul.mubr.bf16.gmra.mrb[0].mxu0 %v608
        %v653 = vpop.f32.mrb[0].mxu0
        %v654 = vadd.f32 %v581, %v653
        %v655 = vpop.f32.mrb[0].mxu0
        %v656 = vpop.f32.mrb[0].mxu0
        %v657 = vadd.f32 %v581, %v656
        %v658 = vpop.f32.mrb[0].mxu0
        %659 = vmatprep.mubr.bf16.mxu0 0
        %660 = vmatmul.mubr.bf16.gmra.mrb[0].mxu0 %v611
        %v661 = vpop.f32.mrb[0].mxu0
        %v662 = vadd.f32 %v581, %v661
        %v663 = vpop.f32.mrb[0].mxu0
        %v664 = vpop.f32.mrb[0].mxu0
        %v665 = vadd.f32 %v581, %v664
        %v666 = vpop.f32.mrb[0].mxu0
        %667 = vmatprep.mubr.bf16.mxu0 0
        %668 = vmatmul.mubr.bf16.gmra.mrb[0].mxu0 %v614
        %v669 = vpop.f32.mrb[0].mxu0
        %v670 = vadd.f32 %v581, %v669
        %v671 = vpop.f32.mrb[0].mxu0
        %v672 = vpop.f32.mrb[0].mxu0
        %v673 = vadd.f32 %v581, %v672
        %v674 = vpop.f32.mrb[0].mxu0
        %675 = vmatprep.mubr.bf16.mxu0 0
        %676 = vmatmul.mubr.bf16.gmra.mrb[0].mxu0 %v617
        %v677 = vpop.f32.mrb[0].mxu0
        %v678 = vadd.f32 %v581, %v677
        %v679 = vpop.f32.mrb[0].mxu0
        %v680 = vpop.f32.mrb[0].mxu0
        %v681 = vadd.f32 %v581, %v680
        %v682 = vpop.f32.mrb[0].mxu0
        %683 = vdwg.mxu0
        %v684 = vmax.f32 %v654, 0.0
        %v685 = vmax.f32 %v657, 0.0
        %v686 = vmax.f32 %v662, 0.0
        %v687 = vmax.f32 %v665, 0.0
        %v688 = vmax.f32 %v670, 0.0
        %v689 = vmax.f32 %v673, 0.0
        %v690 = vmax.f32 %v678, 0.0
        %v691 = vmax.f32 %v681, 0.0
        %v692 = vpack.c.bf16 %v685, %v684
        %v693 = vpack.c.bf16 %v687, %v686
        %v694 = vpack.c.bf16 %v689, %v688
        %v695 = vpack.c.bf16 %v691, %v690
        %s696 = scalar_lea.vmem %s3, 64
        %v697 = vld [vmem:[%s696] sm:$0xf]
        %v698 = vld [vmem:[%s696 + $0x4] sm:$0xf]
        %v699 = vld [vmem:[%s696 + $0x8] sm:$0xf]
        %v700 = vld [vmem:[%s696 + $0xc] sm:$0xf]
        %v701 = vld [vmem:[%s696 + $0x10] sm:$0xf]
        %v702 = vld [vmem:[%s696 + $0x14] sm:$0xf]
        %v703 = vld [vmem:[%s696 + $0x18] sm:$0xf]
        %v704 = vld [vmem:[%s696 + $0x1c] sm:$0xf]
        %s705 = scalar_lea.vmem %s4, 2
        %v706 = vld [vmem:[%s705] sm:$0x1]
        %v708 = vlaneseq
        %v709 = vshrl.u32 %v708, 7
        %v710 = vsub.s32 0, %v709
        %v711 = vrot.slane %v706, %v710
        %v721 = vunpack.c.l.b16 %v697
        %v722 = vunpack.c.l.b16 %v698
        %v723 = vunpack.c.l.b16 %v699
        %v724 = vunpack.c.l.b16 %v700
        %v725 = vunpack.c.l.b16 %v701
        %v726 = vunpack.c.l.b16 %v702
        %v727 = vunpack.c.l.b16 %v703
        %v728 = vunpack.c.l.b16 %v704
        %v729 = vpack.c.b16 %v722, %v721
        %v730 = vpack.c.b16 %v724, %v723
        %v731 = vpack.c.b16 %v726, %v725
        %v732 = vpack.c.b16 %v728, %v727
        %v738 = vsel %vm348, %v692, 0
        %v741 = vsel %vm348, %v693, 0
        %v744 = vsel %vm348, %v694, 0
        %v747 = vsel %vm348, %v695, 0
        %749 = vmatprep.subr.bf16.mxu0 0
        %750 = vmatpush1.bf16.msra.mxu0 %v729
        %751 = vmatprep.subr.bf16.mxu0 0
        %752 = vmatpush1.bf16.msra.mxu0 %v730
        %753 = vmatprep.subr.bf16.mxu0 0
        %754 = vmatpush1.bf16.msra.mxu0 %v731
        %755 = vmatprep.subr.bf16.mxu0 0
        %756 = vmatpush1.bf16.msra.mxu0 %v732
        %757 = vmatprep.subr.bf16.mxu0 0
        %758 = vmatpush1.bf16.msra.mxu0 0
        %759 = vmatprep.subr.bf16.mxu0 0
        %760 = vmatpush1.bf16.msra.mxu0 0
        %761 = vmatprep.subr.bf16.mxu0 0
        %762 = vmatpush1.bf16.msra.mxu0 0
        %763 = vmatprep.subr.bf16.mxu0 0
        %764 = vmatpush1.bf16.msra.mxu0 0
        %765 = vmatprep.subr.bf16.mxu0 0
        %766 = vmatpush1.bf16.msra.mxu0 0
        %767 = vmatprep.subr.bf16.mxu0 0
        %768 = vmatpush1.bf16.msra.mxu0 0
        %769 = vmatprep.subr.bf16.mxu0 0
        %770 = vmatpush1.bf16.msra.mxu0 0
        %771 = vmatprep.subr.bf16.mxu0 0
        %772 = vmatpush1.bf16.msra.mxu0 0
        %773 = vmatprep.subr.bf16.mxu0 0
        %774 = vmatpush1.bf16.msra.mxu0 0
        %775 = vmatprep.subr.bf16.mxu0 0
        %776 = vmatpush1.bf16.msra.mxu0 0
        %777 = vmatprep.subr.bf16.mxu0 0
        %778 = vmatpush1.bf16.msra.mxu0 0
        %779 = vmatprep.subr.bf16.mxu0 0
        %780 = vmatpush1.bf16.msra.mxu0 0
        %781 = vmatprep.mubr.bf16.mxu0 0
        %782 = vmatmul.mubr.bf16.gmra.mrb[0].mxu0 %v738
        %v783 = vpop.f32.mrb[0].mxu0
        %v784 = vadd.f32 %v711, %v783
        %v785 = vpop.f32.mrb[0].mxu0
        %v786 = vpop.f32.mrb[0].mxu0
        %v787 = vadd.f32 %v711, %v786
        %v788 = vpop.f32.mrb[0].mxu0
        %789 = vmatprep.mubr.bf16.mxu0 0
        %790 = vmatmul.mubr.bf16.gmra.mrb[0].mxu0 %v741
        %v791 = vpop.f32.mrb[0].mxu0
        %v792 = vadd.f32 %v711, %v791
        %v793 = vpop.f32.mrb[0].mxu0
        %v794 = vpop.f32.mrb[0].mxu0
        %v795 = vadd.f32 %v711, %v794
        %v796 = vpop.f32.mrb[0].mxu0
        %797 = vmatprep.mubr.bf16.mxu0 0
        %798 = vmatmul.mubr.bf16.gmra.mrb[0].mxu0 %v744
        %v799 = vpop.f32.mrb[0].mxu0
        %v800 = vadd.f32 %v711, %v799
        %v801 = vpop.f32.mrb[0].mxu0
        %v802 = vpop.f32.mrb[0].mxu0
        %v803 = vadd.f32 %v711, %v802
        %v804 = vpop.f32.mrb[0].mxu0
        %805 = vmatprep.mubr.bf16.mxu0 0
        %806 = vmatmul.mubr.bf16.gmra.mrb[0].mxu0 %v747
        %v807 = vpop.f32.mrb[0].mxu0
        %v808 = vadd.f32 %v711, %v807
        %v809 = vpop.f32.mrb[0].mxu0
        %v810 = vpop.f32.mrb[0].mxu0
        %v811 = vadd.f32 %v711, %v810
        %v812 = vpop.f32.mrb[0].mxu0
        %813 = vdwg.mxu0
        %v814 = vmax.f32 %v784, 0.0
        %v815 = vmax.f32 %v787, 0.0
        %v816 = vmax.f32 %v792, 0.0
        %v817 = vmax.f32 %v795, 0.0
        %v818 = vmax.f32 %v800, 0.0
        %v819 = vmax.f32 %v803, 0.0
        %v820 = vmax.f32 %v808, 0.0
        %v821 = vmax.f32 %v811, 0.0
        %v822 = vpack.c.bf16 %v815, %v814
        %v823 = vpack.c.bf16 %v817, %v816
        %v824 = vpack.c.bf16 %v819, %v818
        %v825 = vpack.c.bf16 %v821, %v820
        %s826 = scalar_lea.vmem %s3, 96
        %v827 = vld [vmem:[%s826] sm:$0xf]
        %v828 = vld [vmem:[%s826 + $0x4] sm:$0xf]
        %v829 = vld [vmem:[%s826 + $0x8] sm:$0xf]
        %v830 = vld [vmem:[%s826 + $0xc] sm:$0xf]
        %v831 = vld [vmem:[%s826 + $0x10] sm:$0xf]
        %v832 = vld [vmem:[%s826 + $0x14] sm:$0xf]
        %v833 = vld [vmem:[%s826 + $0x18] sm:$0xf]
        %v834 = vld [vmem:[%s826 + $0x1c] sm:$0xf]
        %s835 = scalar_lea.vmem %s4, 3
        %v836 = vld [vmem:[%s835] sm:$0x1]
        %v838 = vlaneseq
        %v839 = vshrl.u32 %v838, 7
        %v840 = vsub.s32 0, %v839
        %v841 = vrot.slane %v836, %v840
        %v851 = vunpack.c.l.b16 %v827
        %v852 = vunpack.c.l.b16 %v828
        %v853 = vunpack.c.l.b16 %v829
        %v854 = vunpack.c.l.b16 %v830
        %v855 = vunpack.c.l.b16 %v831
        %v856 = vunpack.c.l.b16 %v832
        %v857 = vunpack.c.l.b16 %v833
        %v858 = vunpack.c.l.b16 %v834
        %v859 = vpack.c.b16 %v852, %v851
        %v860 = vpack.c.b16 %v854, %v853
        %v861 = vpack.c.b16 %v856, %v855
        %v862 = vpack.c.b16 %v858, %v857
        %v868 = vsel %vm348, %v822, 0
        %v871 = vsel %vm348, %v823, 0
        %v874 = vsel %vm348, %v824, 0
        %v877 = vsel %vm348, %v825, 0
        %879 = vmatprep.subr.bf16.mxu0 0
        %880 = vmatpush1.bf16.msra.mxu0 %v859
        %881 = vmatprep.subr.bf16.mxu0 0
        %882 = vmatpush1.bf16.msra.mxu0 %v860
        %883 = vmatprep.subr.bf16.mxu0 0
        %884 = vmatpush1.bf16.msra.mxu0 %v861
        %885 = vmatprep.subr.bf16.mxu0 0
        %886 = vmatpush1.bf16.msra.mxu0 %v862
        %887 = vmatprep.subr.bf16.mxu0 0
        %888 = vmatpush1.bf16.msra.mxu0 0
        %889 = vmatprep.subr.bf16.mxu0 0
        %890 = vmatpush1.bf16.msra.mxu0 0
        %891 = vmatprep.subr.bf16.mxu0 0
        %892 = vmatpush1.bf16.msra.mxu0 0
        %893 = vmatprep.subr.bf16.mxu0 0
        %894 = vmatpush1.bf16.msra.mxu0 0
        %895 = vmatprep.subr.bf16.mxu0 0
        %896 = vmatpush1.bf16.msra.mxu0 0
        %897 = vmatprep.subr.bf16.mxu0 0
        %898 = vmatpush1.bf16.msra.mxu0 0
        %899 = vmatprep.subr.bf16.mxu0 0
        %900 = vmatpush1.bf16.msra.mxu0 0
        %901 = vmatprep.subr.bf16.mxu0 0
        %902 = vmatpush1.bf16.msra.mxu0 0
        %903 = vmatprep.subr.bf16.mxu0 0
        %904 = vmatpush1.bf16.msra.mxu0 0
        %905 = vmatprep.subr.bf16.mxu0 0
        %906 = vmatpush1.bf16.msra.mxu0 0
        %907 = vmatprep.subr.bf16.mxu0 0
        %908 = vmatpush1.bf16.msra.mxu0 0
        %909 = vmatprep.subr.bf16.mxu0 0
        %910 = vmatpush1.bf16.msra.mxu0 0
        %911 = vmatprep.mubr.bf16.mxu0 0
        %912 = vmatmul.mubr.bf16.gmra.mrb[0].mxu0 %v868
        %v913 = vpop.f32.mrb[0].mxu0
        %v914 = vadd.f32 %v841, %v913
        %v915 = vpop.f32.mrb[0].mxu0
        %v916 = vpop.f32.mrb[0].mxu0
        %v917 = vadd.f32 %v841, %v916
        %v918 = vpop.f32.mrb[0].mxu0
        %919 = vmatprep.mubr.bf16.mxu0 0
        %920 = vmatmul.mubr.bf16.gmra.mrb[0].mxu0 %v871
        %v921 = vpop.f32.mrb[0].mxu0
        %v922 = vadd.f32 %v841, %v921
        %v923 = vpop.f32.mrb[0].mxu0
        %v924 = vpop.f32.mrb[0].mxu0
        %v925 = vadd.f32 %v841, %v924
        %v926 = vpop.f32.mrb[0].mxu0
        %927 = vmatprep.mubr.bf16.mxu0 0
        %928 = vmatmul.mubr.bf16.gmra.mrb[0].mxu0 %v874
        %v929 = vpop.f32.mrb[0].mxu0
        %v930 = vadd.f32 %v841, %v929
        %v931 = vpop.f32.mrb[0].mxu0
        %v932 = vpop.f32.mrb[0].mxu0
        %v933 = vadd.f32 %v841, %v932
        %v934 = vpop.f32.mrb[0].mxu0
        %935 = vmatprep.mubr.bf16.mxu0 0
        %936 = vmatmul.mubr.bf16.gmra.mrb[0].mxu0 %v877
        %v937 = vpop.f32.mrb[0].mxu0
        %v938 = vadd.f32 %v841, %v937
        %v939 = vpop.f32.mrb[0].mxu0
        %v940 = vpop.f32.mrb[0].mxu0
        %v941 = vadd.f32 %v841, %v940
        %v942 = vpop.f32.mrb[0].mxu0
        %943 = vdwg.mxu0
        %v944 = vmax.f32 %v914, 0.0
        %v945 = vmax.f32 %v917, 0.0
        %v946 = vmax.f32 %v922, 0.0
        %v947 = vmax.f32 %v925, 0.0
        %v948 = vmax.f32 %v930, 0.0
        %v949 = vmax.f32 %v933, 0.0
        %v950 = vmax.f32 %v938, 0.0
        %v951 = vmax.f32 %v941, 0.0
        %v952 = vpack.c.bf16 %v945, %v944
        %v953 = vpack.c.bf16 %v947, %v946
        %v954 = vpack.c.bf16 %v949, %v948
        %v955 = vpack.c.bf16 %v951, %v950
        %s956 = scalar_lea.vmem %s3, 128
        %v957 = vld [vmem:[%s956] sm:$0xf]
        %v958 = vld [vmem:[%s956 + $0x4] sm:$0xf]
        %v959 = vld [vmem:[%s956 + $0x8] sm:$0xf]
        %v960 = vld [vmem:[%s956 + $0xc] sm:$0xf]
        %v961 = vld [vmem:[%s956 + $0x10] sm:$0xf]
        %v962 = vld [vmem:[%s956 + $0x14] sm:$0xf]
        %v963 = vld [vmem:[%s956 + $0x18] sm:$0xf]
        %v964 = vld [vmem:[%s956 + $0x1c] sm:$0xf]
        %s965 = scalar_lea.vmem %s4, 4
        %v966 = vld [vmem:[%s965] sm:$0x1]
        %v968 = vlaneseq
        %v969 = vshrl.u32 %v968, 7
        %v970 = vsub.s32 0, %v969
        %v971 = vrot.slane %v966, %v970
        %v981 = vunpack.c.l.b16 %v957
        %v982 = vunpack.c.l.b16 %v958
        %v983 = vunpack.c.l.b16 %v959
        %v984 = vunpack.c.l.b16 %v960
        %v985 = vunpack.c.l.b16 %v961
        %v986 = vunpack.c.l.b16 %v962
        %v987 = vunpack.c.l.b16 %v963
        %v988 = vunpack.c.l.b16 %v964
        %v989 = vpack.c.b16 %v982, %v981
        %v990 = vpack.c.b16 %v984, %v983
        %v991 = vpack.c.b16 %v986, %v985
        %v992 = vpack.c.b16 %v988, %v987
        %v998 = vsel %vm348, %v952, 0
        %v1001 = vsel %vm348, %v953, 0
        %v1004 = vsel %vm348, %v954, 0
        %v1007 = vsel %vm348, %v955, 0
        %1009 = vmatprep.subr.bf16.mxu0 0
        %1010 = vmatpush1.bf16.msra.mxu0 %v989
        %1011 = vmatprep.subr.bf16.mxu0 0
        %1012 = vmatpush1.bf16.msra.mxu0 %v990
        %1013 = vmatprep.subr.bf16.mxu0 0
        %1014 = vmatpush1.bf16.msra.mxu0 %v991
        %1015 = vmatprep.subr.bf16.mxu0 0
        %1016 = vmatpush1.bf16.msra.mxu0 %v992
        %1017 = vmatprep.subr.bf16.mxu0 0
        %1018 = vmatpush1.bf16.msra.mxu0 0
        %1019 = vmatprep.subr.bf16.mxu0 0
        %1020 = vmatpush1.bf16.msra.mxu0 0
        %1021 = vmatprep.subr.bf16.mxu0 0
        %1022 = vmatpush1.bf16.msra.mxu0 0
        %1023 = vmatprep.subr.bf16.mxu0 0
        %1024 = vmatpush1.bf16.msra.mxu0 0
        %1025 = vmatprep.subr.bf16.mxu0 0
        %1026 = vmatpush1.bf16.msra.mxu0 0
        %1027 = vmatprep.subr.bf16.mxu0 0
        %1028 = vmatpush1.bf16.msra.mxu0 0
        %1029 = vmatprep.subr.bf16.mxu0 0
        %1030 = vmatpush1.bf16.msra.mxu0 0
        %1031 = vmatprep.subr.bf16.mxu0 0
        %1032 = vmatpush1.bf16.msra.mxu0 0
        %1033 = vmatprep.subr.bf16.mxu0 0
        %1034 = vmatpush1.bf16.msra.mxu0 0
        %1035 = vmatprep.subr.bf16.mxu0 0
        %1036 = vmatpush1.bf16.msra.mxu0 0
        %1037 = vmatprep.subr.bf16.mxu0 0
        %1038 = vmatpush1.bf16.msra.mxu0 0
        %1039 = vmatprep.subr.bf16.mxu0 0
        %1040 = vmatpush1.bf16.msra.mxu0 0
        %1041 = vmatprep.mubr.bf16.mxu0 0
        %1042 = vmatmul.mubr.bf16.gmra.mrb[0].mxu0 %v998
        %v1043 = vpop.f32.mrb[0].mxu0
        %v1044 = vadd.f32 %v971, %v1043
        %v1045 = vpop.f32.mrb[0].mxu0
        %v1046 = vpop.f32.mrb[0].mxu0
        %v1047 = vadd.f32 %v971, %v1046
        %v1048 = vpop.f32.mrb[0].mxu0
        %1049 = vmatprep.mubr.bf16.mxu0 0
        %1050 = vmatmul.mubr.bf16.gmra.mrb[0].mxu0 %v1001
        %v1051 = vpop.f32.mrb[0].mxu0
        %v1052 = vadd.f32 %v971, %v1051
        %v1053 = vpop.f32.mrb[0].mxu0
        %v1054 = vpop.f32.mrb[0].mxu0
        %v1055 = vadd.f32 %v971, %v1054
        %v1056 = vpop.f32.mrb[0].mxu0
        %1057 = vmatprep.mubr.bf16.mxu0 0
        %1058 = vmatmul.mubr.bf16.gmra.mrb[0].mxu0 %v1004
        %v1059 = vpop.f32.mrb[0].mxu0
        %v1060 = vadd.f32 %v971, %v1059
        %v1061 = vpop.f32.mrb[0].mxu0
        %v1062 = vpop.f32.mrb[0].mxu0
        %v1063 = vadd.f32 %v971, %v1062
        %v1064 = vpop.f32.mrb[0].mxu0
        %1065 = vmatprep.mubr.bf16.mxu0 0
        %1066 = vmatmul.mubr.bf16.gmra.mrb[0].mxu0 %v1007
        %v1067 = vpop.f32.mrb[0].mxu0
        %v1068 = vadd.f32 %v971, %v1067
        %v1069 = vpop.f32.mrb[0].mxu0
        %v1070 = vpop.f32.mrb[0].mxu0
        %v1071 = vadd.f32 %v971, %v1070
        %v1072 = vpop.f32.mrb[0].mxu0
        %1073 = vdwg.mxu0
        %v1074 = vmax.f32 %v1044, 0.0
        %v1075 = vmax.f32 %v1047, 0.0
        %v1076 = vmax.f32 %v1052, 0.0
        %v1077 = vmax.f32 %v1055, 0.0
        %v1078 = vmax.f32 %v1060, 0.0
        %v1079 = vmax.f32 %v1063, 0.0
        %v1080 = vmax.f32 %v1068, 0.0
        %v1081 = vmax.f32 %v1071, 0.0
        %v1082 = vpack.c.bf16 %v1075, %v1074
        %v1083 = vpack.c.bf16 %v1077, %v1076
        %v1084 = vpack.c.bf16 %v1079, %v1078
        %v1085 = vpack.c.bf16 %v1081, %v1080
        %s1086 = scalar_lea.vmem %s3, 160
        %v1087 = vld [vmem:[%s1086] sm:$0xf]
        %v1088 = vld [vmem:[%s1086 + $0x4] sm:$0xf]
        %v1089 = vld [vmem:[%s1086 + $0x8] sm:$0xf]
        %v1090 = vld [vmem:[%s1086 + $0xc] sm:$0xf]
        %v1091 = vld [vmem:[%s1086 + $0x10] sm:$0xf]
        %v1092 = vld [vmem:[%s1086 + $0x14] sm:$0xf]
        %v1093 = vld [vmem:[%s1086 + $0x18] sm:$0xf]
        %v1094 = vld [vmem:[%s1086 + $0x1c] sm:$0xf]
        %s1095 = scalar_lea.vmem %s4, 5
        %v1096 = vld [vmem:[%s1095] sm:$0x1]
        %v1098 = vlaneseq
        %v1099 = vshrl.u32 %v1098, 7
        %v1100 = vsub.s32 0, %v1099
        %v1101 = vrot.slane %v1096, %v1100
        %v1111 = vunpack.c.l.b16 %v1087
        %v1112 = vunpack.c.l.b16 %v1088
        %v1113 = vunpack.c.l.b16 %v1089
        %v1114 = vunpack.c.l.b16 %v1090
        %v1115 = vunpack.c.l.b16 %v1091
        %v1116 = vunpack.c.l.b16 %v1092
        %v1117 = vunpack.c.l.b16 %v1093
        %v1118 = vunpack.c.l.b16 %v1094
        %v1119 = vpack.c.b16 %v1112, %v1111
        %v1120 = vpack.c.b16 %v1114, %v1113
        %v1121 = vpack.c.b16 %v1116, %v1115
        %v1122 = vpack.c.b16 %v1118, %v1117
        %v1128 = vsel %vm348, %v1082, 0
        %v1131 = vsel %vm348, %v1083, 0
        %v1134 = vsel %vm348, %v1084, 0
        %v1137 = vsel %vm348, %v1085, 0
        %1139 = vmatprep.subr.bf16.mxu0 0
        %1140 = vmatpush1.bf16.msra.mxu0 %v1119
        %1141 = vmatprep.subr.bf16.mxu0 0
        %1142 = vmatpush1.bf16.msra.mxu0 %v1120
        %1143 = vmatprep.subr.bf16.mxu0 0
        %1144 = vmatpush1.bf16.msra.mxu0 %v1121
        %1145 = vmatprep.subr.bf16.mxu0 0
        %1146 = vmatpush1.bf16.msra.mxu0 %v1122
        %1147 = vmatprep.subr.bf16.mxu0 0
        %1148 = vmatpush1.bf16.msra.mxu0 0
        %1149 = vmatprep.subr.bf16.mxu0 0
        %1150 = vmatpush1.bf16.msra.mxu0 0
        %1151 = vmatprep.subr.bf16.mxu0 0
        %1152 = vmatpush1.bf16.msra.mxu0 0
        %1153 = vmatprep.subr.bf16.mxu0 0
        %1154 = vmatpush1.bf16.msra.mxu0 0
        %1155 = vmatprep.subr.bf16.mxu0 0
        %1156 = vmatpush1.bf16.msra.mxu0 0
        %1157 = vmatprep.subr.bf16.mxu0 0
        %1158 = vmatpush1.bf16.msra.mxu0 0
        %1159 = vmatprep.subr.bf16.mxu0 0
        %1160 = vmatpush1.bf16.msra.mxu0 0
        %1161 = vmatprep.subr.bf16.mxu0 0
        %1162 = vmatpush1.bf16.msra.mxu0 0
        %1163 = vmatprep.subr.bf16.mxu0 0
        %1164 = vmatpush1.bf16.msra.mxu0 0
        %1165 = vmatprep.subr.bf16.mxu0 0
        %1166 = vmatpush1.bf16.msra.mxu0 0
        %1167 = vmatprep.subr.bf16.mxu0 0
        %1168 = vmatpush1.bf16.msra.mxu0 0
        %1169 = vmatprep.subr.bf16.mxu0 0
        %1170 = vmatpush1.bf16.msra.mxu0 0
        %1171 = vmatprep.mubr.bf16.mxu0 0
        %1172 = vmatmul.mubr.bf16.gmra.mrb[0].mxu0 %v1128
        %v1173 = vpop.f32.mrb[0].mxu0
        %v1174 = vadd.f32 %v1101, %v1173
        %v1175 = vpop.f32.mrb[0].mxu0
        %v1176 = vpop.f32.mrb[0].mxu0
        %v1177 = vadd.f32 %v1101, %v1176
        %v1178 = vpop.f32.mrb[0].mxu0
        %1179 = vmatprep.mubr.bf16.mxu0 0
        %1180 = vmatmul.mubr.bf16.gmra.mrb[0].mxu0 %v1131
        %v1181 = vpop.f32.mrb[0].mxu0
        %v1182 = vadd.f32 %v1101, %v1181
        %v1183 = vpop.f32.mrb[0].mxu0
        %v1184 = vpop.f32.mrb[0].mxu0
        %v1185 = vadd.f32 %v1101, %v1184
        %v1186 = vpop.f32.mrb[0].mxu0
        %1187 = vmatprep.mubr.bf16.mxu0 0
        %1188 = vmatmul.mubr.bf16.gmra.mrb[0].mxu0 %v1134
        %v1189 = vpop.f32.mrb[0].mxu0
        %v1190 = vadd.f32 %v1101, %v1189
        %v1191 = vpop.f32.mrb[0].mxu0
        %v1192 = vpop.f32.mrb[0].mxu0
        %v1193 = vadd.f32 %v1101, %v1192
        %v1194 = vpop.f32.mrb[0].mxu0
        %1195 = vmatprep.mubr.bf16.mxu0 0
        %1196 = vmatmul.mubr.bf16.gmra.mrb[0].mxu0 %v1137
        %v1197 = vpop.f32.mrb[0].mxu0
        %v1198 = vadd.f32 %v1101, %v1197
        %v1199 = vpop.f32.mrb[0].mxu0
        %v1200 = vpop.f32.mrb[0].mxu0
        %v1201 = vadd.f32 %v1101, %v1200
        %v1202 = vpop.f32.mrb[0].mxu0
        %1203 = vdwg.mxu0
        %v1204 = vmax.f32 %v1174, 0.0
        %v1205 = vmax.f32 %v1177, 0.0
        %v1206 = vmax.f32 %v1182, 0.0
        %v1207 = vmax.f32 %v1185, 0.0
        %v1208 = vmax.f32 %v1190, 0.0
        %v1209 = vmax.f32 %v1193, 0.0
        %v1210 = vmax.f32 %v1198, 0.0
        %v1211 = vmax.f32 %v1201, 0.0
        %v1212 = vpack.c.bf16 %v1205, %v1204
        %v1213 = vpack.c.bf16 %v1207, %v1206
        %v1214 = vpack.c.bf16 %v1209, %v1208
        %v1215 = vpack.c.bf16 %v1211, %v1210
        %v1216 = vld [vmem:[%s5] sm:$0xf]
        %v1217 = vld [vmem:[%s5 + $0x4] sm:$0xf]
        %v1218 = vld [vmem:[%s5 + $0x8] sm:$0xf]
        %v1219 = vld [vmem:[%s5 + $0xc] sm:$0xf]
        %v1220 = vld [vmem:[%s5 + $0x10] sm:$0xf]
        %v1221 = vld [vmem:[%s5 + $0x14] sm:$0xf]
        %v1222 = vld [vmem:[%s5 + $0x18] sm:$0xf]
        %v1223 = vld [vmem:[%s5 + $0x1c] sm:$0xf]
        %v1224 = vld [vmem:[%s6] sm:$0x1]
        %v1226 = vlaneseq
        %v1227 = vshrl.u32 %v1226, 7
        %v1228 = vsub.s32 0, %v1227
        %v1229 = vrot.slane %v1224, %v1228
        %v1239 = vunpack.c.l.b16 %v1216
        %v1240 = vunpack.c.l.b16 %v1217
        %v1241 = vunpack.c.l.b16 %v1218
        %v1242 = vunpack.c.l.b16 %v1219
        %v1243 = vunpack.c.l.b16 %v1220
        %v1244 = vunpack.c.l.b16 %v1221
        %v1245 = vunpack.c.l.b16 %v1222
        %v1246 = vunpack.c.l.b16 %v1223
        %v1247 = vpack.c.b16 %v1240, %v1239
        %v1248 = vpack.c.b16 %v1242, %v1241
        %v1249 = vpack.c.b16 %v1244, %v1243
        %v1250 = vpack.c.b16 %v1246, %v1245
        %v1256 = vsel %vm348, %v1212, 0
        %v1259 = vsel %vm348, %v1213, 0
        %v1262 = vsel %vm348, %v1214, 0
        %v1265 = vsel %vm348, %v1215, 0
        %1267 = vmatprep.subr.bf16.mxu0 0
        %1268 = vmatpush1.bf16.msra.mxu0 %v1247
        %1269 = vmatprep.subr.bf16.mxu0 0
        %1270 = vmatpush1.bf16.msra.mxu0 %v1248
        %1271 = vmatprep.subr.bf16.mxu0 0
        %1272 = vmatpush1.bf16.msra.mxu0 %v1249
        %1273 = vmatprep.subr.bf16.mxu0 0
        %1274 = vmatpush1.bf16.msra.mxu0 %v1250
        %1275 = vmatprep.subr.bf16.mxu0 0
        %1276 = vmatpush1.bf16.msra.mxu0 0
        %1277 = vmatprep.subr.bf16.mxu0 0
        %1278 = vmatpush1.bf16.msra.mxu0 0
        %1279 = vmatprep.subr.bf16.mxu0 0
        %1280 = vmatpush1.bf16.msra.mxu0 0
        %1281 = vmatprep.subr.bf16.mxu0 0
        %1282 = vmatpush1.bf16.msra.mxu0 0
        %1283 = vmatprep.subr.bf16.mxu0 0
        %1284 = vmatpush1.bf16.msra.mxu0 0
        %1285 = vmatprep.subr.bf16.mxu0 0
        %1286 = vmatpush1.bf16.msra.mxu0 0
        %1287 = vmatprep.subr.bf16.mxu0 0
        %1288 = vmatpush1.bf16.msra.mxu0 0
        %1289 = vmatprep.subr.bf16.mxu0 0
        %1290 = vmatpush1.bf16.msra.mxu0 0
        %1291 = vmatprep.subr.bf16.mxu0 0
        %1292 = vmatpush1.bf16.msra.mxu0 0
        %1293 = vmatprep.subr.bf16.mxu0 0
        %1294 = vmatpush1.bf16.msra.mxu0 0
        %1295 = vmatprep.subr.bf16.mxu0 0
        %1296 = vmatpush1.bf16.msra.mxu0 0
        %1297 = vmatprep.subr.bf16.mxu0 0
        %1298 = vmatpush1.bf16.msra.mxu0 0
        %1299 = vmatprep.mubr.bf16.mxu0 0
        %1300 = vmatmul.mubr.bf16.gmra.mrb[0].mxu0 %v1256
        %v1301 = vpop.f32.mrb[0].mxu0
        %v1302 = vadd.f32 %v1229, %v1301
        %v1303 = vpop.f32.mrb[0].mxu0
        %v1304 = vpop.f32.mrb[0].mxu0
        %v1305 = vadd.f32 %v1229, %v1304
        %v1306 = vpop.f32.mrb[0].mxu0
        %1307 = vmatprep.mubr.bf16.mxu0 0
        %1308 = vmatmul.mubr.bf16.gmra.mrb[0].mxu0 %v1259
        %v1309 = vpop.f32.mrb[0].mxu0
        %v1310 = vadd.f32 %v1229, %v1309
        %v1311 = vpop.f32.mrb[0].mxu0
        %v1312 = vpop.f32.mrb[0].mxu0
        %v1313 = vadd.f32 %v1229, %v1312
        %v1314 = vpop.f32.mrb[0].mxu0
        %1315 = vmatprep.mubr.bf16.mxu0 0
        %1316 = vmatmul.mubr.bf16.gmra.mrb[0].mxu0 %v1262
        %v1317 = vpop.f32.mrb[0].mxu0
        %v1318 = vadd.f32 %v1229, %v1317
        %v1319 = vpop.f32.mrb[0].mxu0
        %v1320 = vpop.f32.mrb[0].mxu0
        %v1321 = vadd.f32 %v1229, %v1320
        %v1322 = vpop.f32.mrb[0].mxu0
        %1323 = vmatprep.mubr.bf16.mxu0 0
        %1324 = vmatmul.mubr.bf16.gmra.mrb[0].mxu0 %v1265
        %v1325 = vpop.f32.mrb[0].mxu0
        %v1326 = vadd.f32 %v1229, %v1325
        %v1327 = vpop.f32.mrb[0].mxu0
        %v1328 = vpop.f32.mrb[0].mxu0
        %v1329 = vadd.f32 %v1229, %v1328
        %v1330 = vpop.f32.mrb[0].mxu0
        %1331 = vdwg.mxu0
        %1332 = vmax.xlane.f32.xlu0 %v1302
        %v1333 = vpop.xlane.xlu0 %1332
        %1334 = vmax.xlane.f32.xlu0 %v1305
        %v1335 = vpop.xlane.xlu0 %1334
        %1336 = vmax.xlane.f32.xlu0 %v1310
        %v1337 = vpop.xlane.xlu0 %1336
        %1338 = vmax.xlane.f32.xlu0 %v1313
        %v1339 = vpop.xlane.xlu0 %1338
        %1340 = vmax.xlane.f32.xlu0 %v1318
        %v1341 = vpop.xlane.xlu0 %1340
        %1342 = vmax.xlane.f32.xlu0 %v1321
        %v1343 = vpop.xlane.xlu0 %1342
        %1344 = vmax.xlane.f32.xlu0 %v1326
        %v1345 = vpop.xlane.xlu0 %1344
        %1346 = vmax.xlane.f32.xlu0 %v1329
        %v1347 = vpop.xlane.xlu0 %1346
        %v1348 = vsub.f32 %v1302, %v1333
        %v1349 = vsub.f32 %v1305, %v1335
        %v1350 = vsub.f32 %v1310, %v1337
        %v1351 = vsub.f32 %v1313, %v1339
        %v1352 = vsub.f32 %v1318, %v1341
        %v1353 = vsub.f32 %v1321, %v1343
        %v1354 = vsub.f32 %v1326, %v1345
        %v1355 = vsub.f32 %v1329, %v1347
        %v1356 = vmul.f32 %v1348, 1.442695
        %v1357 = vpow.pop %v1356
        %v1358 = vmul.f32 %v1349, 1.442695
        %v1359 = vpow.pop %v1358
        %v1360 = vmul.f32 %v1350, 1.442695
        %v1361 = vpow.pop %v1360
        %v1362 = vmul.f32 %v1351, 1.442695
        %v1363 = vpow.pop %v1362
        %v1364 = vmul.f32 %v1352, 1.442695
        %v1365 = vpow.pop %v1364
        %v1366 = vmul.f32 %v1353, 1.442695
        %v1367 = vpow.pop %v1366
        %v1368 = vmul.f32 %v1354, 1.442695
        %v1369 = vpow.pop %v1368
        %v1370 = vmul.f32 %v1355, 1.442695
        %v1371 = vpow.pop %v1370
        %1372 = vadd.xlane.f32.xlu0 %v1357
        %v1373 = vpop.xlane.xlu0 %1372
        %1374 = vadd.xlane.f32.xlu0 %v1359
        %v1375 = vpop.xlane.xlu0 %1374
        %1376 = vadd.xlane.f32.xlu0 %v1361
        %v1377 = vpop.xlane.xlu0 %1376
        %1378 = vadd.xlane.f32.xlu0 %v1363
        %v1379 = vpop.xlane.xlu0 %1378
        %1380 = vadd.xlane.f32.xlu0 %v1365
        %v1381 = vpop.xlane.xlu0 %1380
        %1382 = vadd.xlane.f32.xlu0 %v1367
        %v1383 = vpop.xlane.xlu0 %1382
        %1384 = vadd.xlane.f32.xlu0 %v1369
        %v1385 = vpop.xlane.xlu0 %1384
        %1386 = vadd.xlane.f32.xlu0 %v1371
        %v1387 = vpop.xlane.xlu0 %1386
        %v1388 = vlog2.pop %v1373
        %v1389 = vmul.f32 %v1388, 0.6931472
        %v1390 = vlog2.pop %v1375
        %v1391 = vmul.f32 %v1390, 0.6931472
        %v1392 = vlog2.pop %v1377
        %v1393 = vmul.f32 %v1392, 0.6931472
        %v1394 = vlog2.pop %v1379
        %v1395 = vmul.f32 %v1394, 0.6931472
        %v1396 = vlog2.pop %v1381
        %v1397 = vmul.f32 %v1396, 0.6931472
        %v1398 = vlog2.pop %v1383
        %v1399 = vmul.f32 %v1398, 0.6931472
        %v1400 = vlog2.pop %v1385
        %v1401 = vmul.f32 %v1400, 0.6931472
        %v1402 = vlog2.pop %v1387
        %v1403 = vmul.f32 %v1402, 0.6931472
        %v1404 = vsub.f32 %v1348, %v1389
        %v1405 = vsub.f32 %v1349, %v1391
        %v1406 = vsub.f32 %v1350, %v1393
        %v1407 = vsub.f32 %v1351, %v1395
        %v1408 = vsub.f32 %v1352, %v1397
        %v1409 = vsub.f32 %v1353, %v1399
        %v1410 = vsub.f32 %v1354, %v1401
        %v1411 = vsub.f32 %v1355, %v1403
        %1412 = vst [vmem:[%s272] sm:$0xff] %v1404
        %1413 = vst [vmem:[%s272 + $0x8] sm:$0xff] %v1405
        %1414 = vst [vmem:[%s272 + $0x10] sm:$0xff] %v1406
        %1415 = vst [vmem:[%s272 + $0x18] sm:$0xff] %v1407
        %1416 = vst [vmem:[%s272 + $0x20] sm:$0xff] %v1408
        %1417 = vst [vmem:[%s272 + $0x28] sm:$0xff] %v1409
        %1418 = vst [vmem:[%s272 + $0x30] sm:$0xff] %v1410
        %1419 = vst [vmem:[%s272 + $0x38] sm:$0xff] %v1411
        %s1420 = sand.u32 %s181, 1
        %s1421 = scalar_lea.sflag [#allocation3], %s1420
        %s1422 = sand.u32 %s181, 1
        %s1423 = smul.addr %s1422, 64
        %s1424 = scalar_lea.vmem [#allocation2], %s1423
        // Predicated region
        $region49: #{encoder_bn.1} parent=47 // pred_check
          %p1425 = pneg %p191
        $region50: #{encoder_bn.1} parent=47 // pred_check_branch
          %1427 = sbr.rel (%p1425) target = $region52
        $region51: #{encoder_bn.1} parent=47 // pred_region
          %s1428 = smul.u32 8, %s21
          %s1430 = ssub.s32 1024, 1024
          %1431 = vsyncadd %s1421, %s1430
          %s1432 = smul.addr %s1428, 128
          %s1433 = scalar_lea.hbm %s7, %s1432
          %s1434 = sshll.u32 %s1424, 4
          %s1435 = int_to_ptr.vmem [resolvable:$true] %s1434
          %1440 = dma.vmem_to_hbm [thread:$0]  %s1435, 1024, %s1433, %s1421, 128, 128, 8
        $region52: #{encoder_bn.1} parent=47 // pred_fallthru
          _
      $region48: #{encoder_bn.1} parent=5 // pred_fallthru
        _
      %p1441 = scmp.le.s32.totalorder 2, %s16
      // Predicated region
      $region53: #{encoder_bn.1} parent=5 // pred_check
        %p1442 = pneg %p1441
      $region54: #{encoder_bn.1} parent=5 // pred_check_branch
        %1444 = sbr.rel (%p1442) target = $region56
      $region55: #{encoder_bn.1} parent=5 // pred_region
        %s1445 = ssub.s32 %s16, 2
        // Predicated region
        $region57: #{encoder_bn.1} parent=55 // pred_check
          %p1446 = pneg %p197
        $region58: #{encoder_bn.1} parent=55 // pred_check_branch
          %1448 = sbr.rel (%p1446) target = $region60
        $region59: #{encoder_bn.1} parent=55 // pred_region
          %s1449 = sand.u32 %s182, 1
          %s1450 = scalar_lea.sflag [#allocation3], %s1449
          %s1451 = sand.u32 %s182, 1
          %s1452 = smul.addr %s1451, 64
          %s1453 = scalar_lea.vmem [#allocation2], %s1452
          %1454 = dma.done %s1450, 1024
        $region60: #{encoder_bn.1} parent=55 // pred_fallthru
          _
      $region56: #{encoder_bn.1} parent=5 // pred_fallthru
        _
    $region6: #{encoder_bn.1} parent=1 // loop_footer
      %s20 = sadd.s32 1, %s16
    $region7: #{encoder_bn.1} parent=1 // loop_footer_branch
      %15 = sbr.rel target = $region3
    $region8: #{encoder_bn.1} parent=1 // loop_exit
      _
    %1455 = vsyncpa [#allocation3], 1
    %s1456 = scalar_lea.sflag [#allocation3], 1
    %1457 = vsyncpa %s1456, 1

</llo_original>
